<compile_context>
chip_gen: v6e
topology: v6e:2x2x1
jax: 0.10.0
libtpu: 0.0.40
codegen_flags: <defaults>
</compile_context>

<pallas_src>
import math

import jax
import jax.numpy as jnp
from jax.experimental import pallas as pl
from jax.experimental.pallas import tpu as pltpu

# ---- model config (small, consistent with the module) ----
B = 2          # batch
T = 8          # seq len (== maxlen)
C = 32         # d_model
H = 4          # n_heads
DH = C // H    # head dim
D_INNER = 4 * C
EPS = 1e-5     # norm_eps
NEG_INF = -1e30


def _layernorm(x, w, b):
    mean = jnp.mean(x, axis=-1, keepdims=True)
    var = jnp.mean((x - mean) ** 2, axis=-1, keepdims=True)
    return (x - mean) * jax.lax.rsqrt(var + EPS) * w + b


def _gelu_tanh(u):
    # GELU(approximate='tanh')
    c = math.sqrt(2.0 / math.pi)
    return 0.5 * u * (1.0 + jnp.tanh(c * (u + 0.044715 * u * u * u)))


def block_kernel(x_ref,
                 ln1_w_ref, ln1_b_ref,
                 w_q_ref, b_q_ref, w_k_ref, b_k_ref, w_v_ref, b_v_ref,
                 w_ao_ref, b_ao_ref,
                 ln2_w_ref, ln2_b_ref,
                 w_fc_ref, b_fc_ref,
                 w_pr_ref, b_pr_ref,
                 o_ref):
    x = x_ref[...]                       # (B, T, C) f32
    xf = x.reshape(B * T, C)             # merge leading dims only (layout-safe)

    # ---------------- attention branch ----------------
    h1 = _layernorm(xf, ln1_w_ref[...], ln1_b_ref[...])          # (B*T, C) f32
    h1_bf = h1.astype(jnp.bfloat16)

    # Causal mask as an additive bias, built once and hoisted out of the loop.
    row = jax.lax.broadcasted_iota(jnp.int32, (T, T), 0)
    col = jax.lax.broadcasted_iota(jnp.int32, (T, T), 1)
    mask_bias = jnp.where(col <= row, 0.0, NEG_INF).astype(jnp.float32)
    mask_bias_b = jnp.broadcast_to(mask_bias[None], (B, T, T))    # (B, T, T)

    scale = 1.0 / math.sqrt(DH)

    attn_acc = jnp.zeros((B * T, C), jnp.float32)
    for hh in range(H):   # static loop; head weights indexed on the leading dim
        wq = w_q_ref[hh]                  # (C, DH) bf16 -- no lane-offset slices
        wk = w_k_ref[hh]
        wv = w_v_ref[hh]

        qh = (jnp.dot(h1_bf, wq, preferred_element_type=jnp.float32)
              + b_q_ref[hh]) * scale                              # (B*T, DH) f32
        kh = jnp.dot(h1_bf, wk, preferred_element_type=jnp.float32) + b_k_ref[hh]
        vh = jnp.dot(h1_bf, wv, preferred_element_type=jnp.float32) + b_v_ref[hh]

        # split leading dim only: (B*T, DH) -> (B, T, DH)
        qb = qh.reshape(B, T, DH).astype(jnp.bfloat16)
        kb = kh.reshape(B, T, DH).astype(jnp.bfloat16)
        vb = vh.reshape(B, T, DH).astype(jnp.bfloat16)

        # batched over B (single batch dim), bf16 operands, f32 accumulate
        s = jnp.einsum('btd,bsd->bts', qb, kb,
                       preferred_element_type=jnp.float32)        # (B, T, T)
        s = s + mask_bias_b
        s = s - jnp.max(s, axis=-1, keepdims=True)
        p = jnp.exp(s)
        p = p * pl.reciprocal(jnp.sum(p, axis=-1, keepdims=True), approx=True)

        yb = jnp.einsum('bts,bsd->btd', p.astype(jnp.bfloat16), vb,
                        preferred_element_type=jnp.float32)       # (B, T, DH)
        yh = yb.reshape(B * T, DH).astype(jnp.bfloat16)

        # output projection folded per head: y @ W_o == sum_h y_h @ W_o[h]
        attn_acc = attn_acc + jnp.dot(yh, w_ao_ref[hh],
                                      preferred_element_type=jnp.float32)

    x1 = xf + attn_acc + b_ao_ref[...]                            # f32 residual

    # ---------------- MLP branch ----------------
    h2 = _layernorm(x1, ln2_w_ref[...], ln2_b_ref[...])
    u = jnp.dot(h2.astype(jnp.bfloat16), w_fc_ref[...],
                preferred_element_type=jnp.float32) + b_fc_ref[...]   # (B*T, 4C)
    u = _gelu_tanh(u)
    mlp = jnp.dot(u.astype(jnp.bfloat16), w_pr_ref[...],
                  preferred_element_type=jnp.float32) + b_pr_ref[...]

    o_ref[...] = (x1 + mlp).reshape(B, T, C)


def gpt_block(x, params):
    (ln1_w, ln1_b, w_qkv, b_qkv, w_ao, b_ao,
     ln2_w, ln2_b, w_fc, b_fc, w_pr, b_pr) = params

    # Split fused QKV into per-head stacked weights OUTSIDE the kernel so the
    # kernel never slices a matmul output at non-aligned lane offsets.
    w_q, w_k, w_v = jnp.split(w_qkv, 3, axis=1)     # each (C, C)
    b_q, b_k, b_v = jnp.split(b_qkv, 3, axis=1)     # each (1, C)

    def per_head_w(w):                              # (C, C) -> (H, C, DH) bf16
        return w.reshape(C, H, DH).transpose(1, 0, 2).astype(jnp.bfloat16)

    def per_head_b(b):                              # (1, C) -> (H, 1, DH) f32
        return b.reshape(1, H, DH).transpose(1, 0, 2)

    w_q_h, w_k_h, w_v_h = per_head_w(w_q), per_head_w(w_k), per_head_w(w_v)
    b_q_h, b_k_h, b_v_h = per_head_b(b_q), per_head_b(b_k), per_head_b(b_v)
    w_ao_h = w_ao.reshape(H, DH, C).astype(jnp.bfloat16)   # rows grouped per head
    w_fc_bf = w_fc.astype(jnp.bfloat16)
    w_pr_bf = w_pr.astype(jnp.bfloat16)

    args = (x, ln1_w, ln1_b,
            w_q_h, b_q_h, w_k_h, b_k_h, w_v_h, b_v_h,
            w_ao_h, b_ao, ln2_w, ln2_b,
            w_fc_bf, b_fc, w_pr_bf, b_pr)

    def full_spec(a):
        n = a.ndim

        def idx(i):
            return (0,) * n

        return pl.BlockSpec(a.shape, idx)

    in_specs = [pl.BlockSpec((B, T, C), lambda i: (0, 0, 0))]
    in_specs += [full_spec(a) for a in args[1:]]

    # Single grid step: whole (B, T, C) tensor processed at once (B is tiny,
    # so a per-batch grid would just add pipeline overhead and re-stage the
    # weights).  TODO(synk): on v7x, a parallel batch axis would let the 2nd
    # TensorCore participate once B grows.
    return pl.pallas_call(
        block_kernel,
        out_shape=jax.ShapeDtypeStruct((B, T, C), jnp.float32),
        grid_spec=pltpu.PrefetchScalarGridSpec(
            num_scalar_prefetch=0,
            grid=(1,),
            in_specs=in_specs,
            out_specs=pl.BlockSpec((B, T, C), lambda i: (0, 0, 0)),
        ),
        compiler_params=pltpu.CompilerParams(
            dimension_semantics=("arbitrary",)),
    )(*args)


# ---------------- pure-JAX reference (for sanity check) ----------------
def gpt_block_ref(x, params):
    (ln1_w, ln1_b, w_qkv, b_qkv, w_ao, b_ao,
     ln2_w, ln2_b, w_fc, b_fc, w_pr, b_pr) = params

    def ln(v, w, b):
        m = jnp.mean(v, -1, keepdims=True)
        var = jnp.mean((v - m) ** 2, -1, keepdims=True)
        return (v - m) / jnp.sqrt(var + EPS) * w + b

    h = ln(x, ln1_w, ln1_b)
    qkv = h @ w_qkv + b_qkv
    q, k, v = jnp.split(qkv, 3, axis=-1)
    q = q.reshape(B, T, H, DH).transpose(0, 2, 1, 3)
    k = k.reshape(B, T, H, DH).transpose(0, 2, 1, 3)
    v = v.reshape(B, T, H, DH).transpose(0, 2, 1, 3)
    s = (q @ k.transpose(0, 1, 3, 2)) / math.sqrt(DH)
    mask = jnp.tril(jnp.ones((T, T), bool))
    s = jnp.where(mask[None, None], s, -jnp.inf)
    p = jax.nn.softmax(s, axis=-1)
    y = (p @ v).transpose(0, 2, 1, 3).reshape(B, T, C)
    x1 = x + (y @ w_ao + b_ao)

    h2 = ln(x1, ln2_w, ln2_b)
    u = h2 @ w_fc + b_fc
    c = math.sqrt(2.0 / math.pi)
    u = 0.5 * u * (1.0 + jnp.tanh(c * (u + 0.044715 * u ** 3)))
    return x1 + (u @ w_pr + b_pr)


def make_params(key):
    ks = jax.random.split(key, 8)
    scale = 0.02
    ln1_w = jnp.ones((1, C), jnp.float32)
    ln1_b = jnp.zeros((1, C), jnp.float32)
    w_qkv = scale * jax.random.normal(ks[0], (C, 3 * C), jnp.float32)
    b_qkv = scale * jax.random.normal(ks[1], (1, 3 * C), jnp.float32)
    w_ao = scale * jax.random.normal(ks[2], (C, C), jnp.float32)
    b_ao = scale * jax.random.normal(ks[3], (1, C), jnp.float32)
    ln2_w = jnp.ones((1, C), jnp.float32)
    ln2_b = jnp.zeros((1, C), jnp.float32)
    w_fc = scale * jax.random.normal(ks[4], (C, D_INNER), jnp.float32)
    b_fc = scale * jax.random.normal(ks[5], (1, D_INNER), jnp.float32)
    w_pr = scale * jax.random.normal(ks[6], (D_INNER, C), jnp.float32)
    b_pr = scale * jax.random.normal(ks[7], (1, C), jnp.float32)
    return (ln1_w, ln1_b, w_qkv, b_qkv, w_ao, b_ao,
            ln2_w, ln2_b, w_fc, b_fc, w_pr, b_pr)


if __name__ == "__main__":
    key = jax.random.PRNGKey(0)
    kx, kp = jax.random.split(key)
    x = jax.random.normal(kx, (B, T, C), jnp.float32)
    params = make_params(kp)

    out = gpt_block(x, params)
    out = jax.block_until_ready(out)

    ref = gpt_block_ref(x, params)
    assert out.shape == (B, T, C)
    # tolerance loosened vs f32-only version because matmuls run in bf16
    assert jnp.allclose(out, ref, rtol=1e-2, atol=1e-2), (
        float(jnp.max(jnp.abs(out - ref))))
    print("KERNEL_OK")
</pallas_src>

<mosaic_0001>
module attributes {stable_mosaic.version = 11 : i64} {
  func.func @block_kernel(%arg0: i32, %arg1: memref<2x8x32xf32, #tpu.memory_space<vmem>>, %arg2: memref<1x32xf32, #tpu.memory_space<vmem>>, %arg3: memref<1x32xf32, #tpu.memory_space<vmem>>, %arg4: memref<4x32x8xbf16, #tpu.memory_space<vmem>>, %arg5: memref<4x1x8xf32, #tpu.memory_space<vmem>>, %arg6: memref<4x32x8xbf16, #tpu.memory_space<vmem>>, %arg7: memref<4x1x8xf32, #tpu.memory_space<vmem>>, %arg8: memref<4x32x8xbf16, #tpu.memory_space<vmem>>, %arg9: memref<4x1x8xf32, #tpu.memory_space<vmem>>, %arg10: memref<4x8x32xbf16, #tpu.memory_space<vmem>>, %arg11: memref<1x32xf32, #tpu.memory_space<vmem>>, %arg12: memref<1x32xf32, #tpu.memory_space<vmem>>, %arg13: memref<1x32xf32, #tpu.memory_space<vmem>>, %arg14: memref<32x128xbf16, #tpu.memory_space<vmem>>, %arg15: memref<1x128xf32, #tpu.memory_space<vmem>>, %arg16: memref<128x32xbf16, #tpu.memory_space<vmem>>, %arg17: memref<1x32xf32, #tpu.memory_space<vmem>>, %arg18: memref<2x8x32xf32, #tpu.memory_space<vmem>>) attributes {dimension_semantics = [#tpu.dimension_semantics<arbitrary>], iteration_bounds = array<i64: 1>, scalar_prefetch = 0 : i64, scratch_operands = 0 : i64, tpu.core_type = #tpu.core_type<tc>, window_params = [{pipeline_mode = #tpu.pipeline_mode<synchronous>, transform_indices = @transform_0, window_bounds = array<i64: 2, 8, 32>}, {pipeline_mode = #tpu.pipeline_mode<synchronous>, transform_indices = @transform_1, window_bounds = array<i64: 1, 32>}, {pipeline_mode = #tpu.pipeline_mode<synchronous>, transform_indices = @transform_2, window_bounds = array<i64: 1, 32>}, {pipeline_mode = #tpu.pipeline_mode<synchronous>, transform_indices = @transform_3, window_bounds = array<i64: 4, 32, 8>}, {pipeline_mode = #tpu.pipeline_mode<synchronous>, transform_indices = @transform_4, window_bounds = array<i64: 4, 1, 8>}, {pipeline_mode = #tpu.pipeline_mode<synchronous>, transform_indices = @transform_5, window_bounds = array<i64: 4, 32, 8>}, {pipeline_mode = #tpu.pipeline_mode<synchronous>, transform_indices = @transform_6, window_bounds = array<i64: 4, 1, 8>}, {pipeline_mode = #tpu.pipeline_mode<synchronous>, transform_indices = @transform_7, window_bounds = array<i64: 4, 32, 8>}, {pipeline_mode = #tpu.pipeline_mode<synchronous>, transform_indices = @transform_8, window_bounds = array<i64: 4, 1, 8>}, {pipeline_mode = #tpu.pipeline_mode<synchronous>, transform_indices = @transform_9, window_bounds = array<i64: 4, 8, 32>}, {pipeline_mode = #tpu.pipeline_mode<synchronous>, transform_indices = @transform_10, window_bounds = array<i64: 1, 32>}, {pipeline_mode = #tpu.pipeline_mode<synchronous>, transform_indices = @transform_11, window_bounds = array<i64: 1, 32>}, {pipeline_mode = #tpu.pipeline_mode<synchronous>, transform_indices = @transform_12, window_bounds = array<i64: 1, 32>}, {pipeline_mode = #tpu.pipeline_mode<synchronous>, transform_indices = @transform_13, window_bounds = array<i64: 32, 128>}, {pipeline_mode = #tpu.pipeline_mode<synchronous>, transform_indices = @transform_14, window_bounds = array<i64: 1, 128>}, {pipeline_mode = #tpu.pipeline_mode<synchronous>, transform_indices = @transform_15, window_bounds = array<i64: 128, 32>}, {pipeline_mode = #tpu.pipeline_mode<synchronous>, transform_indices = @transform_16, window_bounds = array<i64: 1, 32>}, {pipeline_mode = #tpu.pipeline_mode<synchronous>, transform_indices = @transform_17, window_bounds = array<i64: 2, 8, 32>}]} {
    %c0 = arith.constant 0 : index
    %c0_0 = arith.constant 0 : index
    %c0_1 = arith.constant 0 : index
    %0 = vector.load %arg1[%c0, %c0_0, %c0_1] : memref<2x8x32xf32, #tpu.memory_space<vmem>>, vector<2x8x32xf32>
    %1 = vector.shape_cast %0 : vector<2x8x32xf32> to vector<16x32xf32>
    %c0_2 = arith.constant 0 : index
    %c0_3 = arith.constant 0 : index
    %2 = vector.load %arg2[%c0_2, %c0_3] : memref<1x32xf32, #tpu.memory_space<vmem>>, vector<1x32xf32>
    %c0_4 = arith.constant 0 : index
    %c0_5 = arith.constant 0 : index
    %3 = vector.load %arg3[%c0_4, %c0_5] : memref<1x32xf32, #tpu.memory_space<vmem>>, vector<1x32xf32>
    %cst = arith.constant dense<0.000000e+00> : vector<16xf32>
    %4 = vector.multi_reduction <add>, %1, %cst [1] : vector<16x32xf32> to vector<16xf32>
    %5 = vector.shape_cast %4 : vector<16xf32> to vector<16x1xf32>
    %cst_6 = arith.constant 3.200000e+01 : f32
    %6 = vector.broadcast %cst_6 : f32 to vector<16x1xf32>
    %7 = arith.divf %5, %6 : vector<16x1xf32>
    %8 = vector.broadcast %7 : vector<16x1xf32> to vector<16x32xf32>
    %9 = arith.subf %1, %8 : vector<16x32xf32>
    %10 = arith.mulf %9, %9 : vector<16x32xf32>
    %cst_7 = arith.constant dense<0.000000e+00> : vector<16xf32>
    %11 = vector.multi_reduction <add>, %10, %cst_7 [1] : vector<16x32xf32> to vector<16xf32>
    %12 = vector.shape_cast %11 : vector<16xf32> to vector<16x1xf32>
    %cst_8 = arith.constant 3.200000e+01 : f32
    %13 = vector.broadcast %cst_8 : f32 to vector<16x1xf32>
    %14 = arith.divf %12, %13 : vector<16x1xf32>
    %15 = vector.broadcast %7 : vector<16x1xf32> to vector<16x32xf32>
    %16 = arith.subf %1, %15 : vector<16x32xf32>
    %cst_9 = arith.constant 9.99999974E-6 : f32
    %17 = vector.broadcast %cst_9 : f32 to vector<16x1xf32>
    %18 = arith.addf %14, %17 : vector<16x1xf32>
    %19 = math.rsqrt %18 : vector<16x1xf32>
    %20 = vector.broadcast %19 : vector<16x1xf32> to vector<16x32xf32>
    %21 = arith.mulf %16, %20 : vector<16x32xf32>
    %22 = vector.broadcast %2 : vector<1x32xf32> to vector<16x32xf32>
    %23 = arith.mulf %21, %22 : vector<16x32xf32>
    %24 = vector.broadcast %3 : vector<1x32xf32> to vector<16x32xf32>
    %25 = arith.addf %23, %24 : vector<16x32xf32>
    %26 = arith.truncf %25 : vector<16x32xf32> to vector<16x32xbf16>
    %27 = tpu.iota {dimensions = array<i32: 0>} : vector<8x8xi32>
    %28 = tpu.iota {dimensions = array<i32: 1>} : vector<8x8xi32>
    %29 = arith.cmpi sle, %28, %27 : vector<8x8xi32>
    %cst_10 = arith.constant 0.000000e+00 : f32
    %cst_11 = arith.constant -1.000000e+30 : f32
    %30 = vector.broadcast %cst_10 : f32 to vector<8x8xf32>
    %31 = vector.broadcast %cst_11 : f32 to vector<8x8xf32>
    %32 = arith.select %29, %30, %31 : vector<8x8xi1>, vector<8x8xf32>
    %33 = vector.shape_cast %32 : vector<8x8xf32> to vector<1x8x8xf32>
    %34 = vector.shape_cast %33 : vector<1x8x8xf32> to vector<1x8x8xf32>
    %35 = vector.broadcast %34 : vector<1x8x8xf32> to vector<2x8x8xf32>
    %cst_12 = arith.constant 0.000000e+00 : f32
    %36 = vector.broadcast %cst_12 : f32 to vector<16x32xf32>
    %c0_13 = arith.constant 0 : index
    %c0_14 = arith.constant 0 : index
    %c0_15 = arith.constant 0 : index
    %37 = vector.load %arg4[%c0_13, %c0_14, %c0_15] : memref<4x32x8xbf16, #tpu.memory_space<vmem>>, vector<1x32x8xbf16>
    %38 = vector.shape_cast %37 : vector<1x32x8xbf16> to vector<32x8xbf16>
    %c0_16 = arith.constant 0 : index
    %c0_17 = arith.constant 0 : index
    %c0_18 = arith.constant 0 : index
    %39 = vector.load %arg6[%c0_16, %c0_17, %c0_18] : memref<4x32x8xbf16, #tpu.memory_space<vmem>>, vector<1x32x8xbf16>
    %40 = vector.shape_cast %39 : vector<1x32x8xbf16> to vector<32x8xbf16>
    %c0_19 = arith.constant 0 : index
    %c0_20 = arith.constant 0 : index
    %c0_21 = arith.constant 0 : index
    %41 = vector.load %arg8[%c0_19, %c0_20, %c0_21] : memref<4x32x8xbf16, #tpu.memory_space<vmem>>, vector<1x32x8xbf16>
    %42 = vector.shape_cast %41 : vector<1x32x8xbf16> to vector<32x8xbf16>
    %cst_22 = arith.constant dense<0.000000e+00> : vector<16x8xf32>
    %43 = tpu.matmul %26, %38, %cst_22 {dimension_numbers = #tpu.dot_dimension_numbers<[1], [0], [0], [1], [0, 0, 1, 1], [], []>} : vector<16x32xbf16>, vector<32x8xbf16>, vector<16x8xf32> -> vector<16x8xf32>
    %c0_23 = arith.constant 0 : index
    %c0_24 = arith.constant 0 : index
    %c0_25 = arith.constant 0 : index
    %44 = vector.load %arg5[%c0_23, %c0_24, %c0_25] : memref<4x1x8xf32, #tpu.memory_space<vmem>>, vector<1x1x8xf32>
    %45 = vector.shape_cast %44 : vector<1x1x8xf32> to vector<1x8xf32>
    %46 = vector.broadcast %45 : vector<1x8xf32> to vector<16x8xf32>
    %47 = arith.addf %43, %46 : vector<16x8xf32>
    %cst_26 = arith.constant 0.353553385 : f32
    %48 = vector.broadcast %cst_26 : f32 to vector<16x8xf32>
    %49 = arith.mulf %47, %48 : vector<16x8xf32>
    %cst_27 = arith.constant dense<0.000000e+00> : vector<16x8xf32>
    %50 = tpu.matmul %26, %40, %cst_27 {dimension_numbers = #tpu.dot_dimension_numbers<[1], [0], [0], [1], [0, 0, 1, 1], [], []>} : vector<16x32xbf16>, vector<32x8xbf16>, vector<16x8xf32> -> vector<16x8xf32>
    %c0_28 = arith.constant 0 : index
    %c0_29 = arith.constant 0 : index
    %c0_30 = arith.constant 0 : index
    %51 = vector.load %arg7[%c0_28, %c0_29, %c0_30] : memref<4x1x8xf32, #tpu.memory_space<vmem>>, vector<1x1x8xf32>
    %52 = vector.shape_cast %51 : vector<1x1x8xf32> to vector<1x8xf32>
    %53 = vector.broadcast %52 : vector<1x8xf32> to vector<16x8xf32>
    %54 = arith.addf %50, %53 : vector<16x8xf32>
    %cst_31 = arith.constant dense<0.000000e+00> : vector<16x8xf32>
    %55 = tpu.matmul %26, %42, %cst_31 {dimension_numbers = #tpu.dot_dimension_numbers<[1], [0], [0], [1], [0, 0, 1, 1], [], []>} : vector<16x32xbf16>, vector<32x8xbf16>, vector<16x8xf32> -> vector<16x8xf32>
    %c0_32 = arith.constant 0 : index
    %c0_33 = arith.constant 0 : index
    %c0_34 = arith.constant 0 : index
    %56 = vector.load %arg9[%c0_32, %c0_33, %c0_34] : memref<4x1x8xf32, #tpu.memory_space<vmem>>, vector<1x1x8xf32>
    %57 = vector.shape_cast %56 : vector<1x1x8xf32> to vector<1x8xf32>
    %58 = vector.broadcast %57 : vector<1x8xf32> to vector<16x8xf32>
    %59 = arith.addf %55, %58 : vector<16x8xf32>
    %60 = vector.shape_cast %49 : vector<16x8xf32> to vector<2x8x8xf32>
    %61 = arith.truncf %60 : vector<2x8x8xf32> to vector<2x8x8xbf16>
    %62 = vector.shape_cast %54 : vector<16x8xf32> to vector<2x8x8xf32>
    %63 = arith.truncf %62 : vector<2x8x8xf32> to vector<2x8x8xbf16>
    %64 = vector.shape_cast %59 : vector<16x8xf32> to vector<2x8x8xf32>
    %65 = arith.truncf %64 : vector<2x8x8xf32> to vector<2x8x8xbf16>
    "tpu.trace_start"() <{level = 10 : i32, message = "btd,bsd->bts"}> : () -> ()
    %cst_35 = arith.constant dense<0.000000e+00> : vector<2x8x8xf32>
    %66 = tpu.matmul %61, %63, %cst_35 {dimension_numbers = #tpu.dot_dimension_numbers<[2], [2], [1], [1], [0, 0, 0, 1, 1, 1], [0], [0]>} : vector<2x8x8xbf16>, vector<2x8x8xbf16>, vector<2x8x8xf32> -> vector<2x8x8xf32>
    "tpu.trace_stop"() : () -> ()
    %67 = arith.addf %66, %35 : vector<2x8x8xf32>
    %cst_36 = arith.constant dense<0xFF800000> : vector<2x8xf32>
    %68 = vector.multi_reduction <maximumf>, %67, %cst_36 [2] : vector<2x8x8xf32> to vector<2x8xf32>
    %69 = vector.shape_cast %68 : vector<2x8xf32> to vector<2x8x1xf32>
    %70 = vector.broadcast %69 : vector<2x8x1xf32> to vector<2x8x8xf32>
    %71 = arith.subf %67, %70 : vector<2x8x8xf32>
    %72 = math.exp %71 : vector<2x8x8xf32>
    %cst_37 = arith.constant dense<0.000000e+00> : vector<2x8xf32>
    %73 = vector.multi_reduction <add>, %72, %cst_37 [2] : vector<2x8x8xf32> to vector<2x8xf32>
    %74 = vector.shape_cast %73 : vector<2x8xf32> to vector<2x8x1xf32>
    %75 = tpu.reciprocal %74 {approx = true} : vector<2x8x1xf32> -> vector<2x8x1xf32>
    %76 = vector.broadcast %75 : vector<2x8x1xf32> to vector<2x8x8xf32>
    %77 = arith.mulf %72, %76 : vector<2x8x8xf32>
    %78 = arith.truncf %77 : vector<2x8x8xf32> to vector<2x8x8xbf16>
    "tpu.trace_start"() <{level = 10 : i32, message = "bts,bsd->btd"}> : () -> ()
    %cst_38 = arith.constant dense<0.000000e+00> : vector<2x8x8xf32>
    %79 = tpu.matmul %78, %65, %cst_38 {dimension_numbers = #tpu.dot_dimension_numbers<[2], [1], [1], [2], [0, 0, 0, 1, 1, 2], [0], [0]>} : vector<2x8x8xbf16>, vector<2x8x8xbf16>, vector<2x8x8xf32> -> vector<2x8x8xf32>
    "tpu.trace_stop"() : () -> ()
    %80 = vector.shape_cast %79 : vector<2x8x8xf32> to vector<16x8xf32>
    %81 = arith.truncf %80 : vector<16x8xf32> to vector<16x8xbf16>
    %c0_39 = arith.constant 0 : index
    %c0_40 = arith.constant 0 : index
    %c0_41 = arith.constant 0 : index
    %82 = vector.load %arg10[%c0_39, %c0_40, %c0_41] : memref<4x8x32xbf16, #tpu.memory_space<vmem>>, vector<1x8x32xbf16>
    %83 = vector.shape_cast %82 : vector<1x8x32xbf16> to vector<8x32xbf16>
    %cst_42 = arith.constant dense<0.000000e+00> : vector<16x32xf32>
    %84 = tpu.matmul %81, %83, %cst_42 {dimension_numbers = #tpu.dot_dimension_numbers<[1], [0], [0], [1], [0, 0, 1, 1], [], []>} : vector<16x8xbf16>, vector<8x32xbf16>, vector<16x32xf32> -> vector<16x32xf32>
    %85 = arith.addf %36, %84 : vector<16x32xf32>
    %c1 = arith.constant 1 : index
    %c0_43 = arith.constant 0 : index
    %c0_44 = arith.constant 0 : index
    %86 = vector.load %arg4[%c1, %c0_43, %c0_44] : memref<4x32x8xbf16, #tpu.memory_space<vmem>>, vector<1x32x8xbf16>
    %87 = vector.shape_cast %86 : vector<1x32x8xbf16> to vector<32x8xbf16>
    %c1_45 = arith.constant 1 : index
    %c0_46 = arith.constant 0 : index
    %c0_47 = arith.constant 0 : index
    %88 = vector.load %arg6[%c1_45, %c0_46, %c0_47] : memref<4x32x8xbf16, #tpu.memory_space<vmem>>, vector<1x32x8xbf16>
    %89 = vector.shape_cast %88 : vector<1x32x8xbf16> to vector<32x8xbf16>
    %c1_48 = arith.constant 1 : index
    %c0_49 = arith.constant 0 : index
    %c0_50 = arith.constant 0 : index
    %90 = vector.load %arg8[%c1_48, %c0_49, %c0_50] : memref<4x32x8xbf16, #tpu.memory_space<vmem>>, vector<1x32x8xbf16>
    %91 = vector.shape_cast %90 : vector<1x32x8xbf16> to vector<32x8xbf16>
    %cst_51 = arith.constant dense<0.000000e+00> : vector<16x8xf32>
    %92 = tpu.matmul %26, %87, %cst_51 {dimension_numbers = #tpu.dot_dimension_numbers<[1], [0], [0], [1], [0, 0, 1, 1], [], []>} : vector<16x32xbf16>, vector<32x8xbf16>, vector<16x8xf32> -> vector<16x8xf32>
    %c1_52 = arith.constant 1 : index
    %c0_53 = arith.constant 0 : index
    %c0_54 = arith.constant 0 : index
    %93 = vector.load %arg5[%c1_52, %c0_53, %c0_54] : memref<4x1x8xf32, #tpu.memory_space<vmem>>, vector<1x1x8xf32>
    %94 = vector.shape_cast %93 : vector<1x1x8xf32> to vector<1x8xf32>
    %95 = vector.broadcast %94 : vector<1x8xf32> to vector<16x8xf32>
    %96 = arith.addf %92, %95 : vector<16x8xf32>
    %cst_55 = arith.constant 0.353553385 : f32
    %97 = vector.broadcast %cst_55 : f32 to vector<16x8xf32>
    %98 = arith.mulf %96, %97 : vector<16x8xf32>
    %cst_56 = arith.constant dense<0.000000e+00> : vector<16x8xf32>
    %99 = tpu.matmul %26, %89, %cst_56 {dimension_numbers = #tpu.dot_dimension_numbers<[1], [0], [0], [1], [0, 0, 1, 1], [], []>} : vector<16x32xbf16>, vector<32x8xbf16>, vector<16x8xf32> -> vector<16x8xf32>
    %c1_57 = arith.constant 1 : index
    %c0_58 = arith.constant 0 : index
    %c0_59 = arith.constant 0 : index
    %100 = vector.load %arg7[%c1_57, %c0_58, %c0_59] : memref<4x1x8xf32, #tpu.memory_space<vmem>>, vector<1x1x8xf32>
    %101 = vector.shape_cast %100 : vector<1x1x8xf32> to vector<1x8xf32>
    %102 = vector.broadcast %101 : vector<1x8xf32> to vector<16x8xf32>
    %103 = arith.addf %99, %102 : vector<16x8xf32>
    %cst_60 = arith.constant dense<0.000000e+00> : vector<16x8xf32>
    %104 = tpu.matmul %26, %91, %cst_60 {dimension_numbers = #tpu.dot_dimension_numbers<[1], [0], [0], [1], [0, 0, 1, 1], [], []>} : vector<16x32xbf16>, vector<32x8xbf16>, vector<16x8xf32> -> vector<16x8xf32>
    %c1_61 = arith.constant 1 : index
    %c0_62 = arith.constant 0 : index
    %c0_63 = arith.constant 0 : index
    %105 = vector.load %arg9[%c1_61, %c0_62, %c0_63] : memref<4x1x8xf32, #tpu.memory_space<vmem>>, vector<1x1x8xf32>
    %106 = vector.shape_cast %105 : vector<1x1x8xf32> to vector<1x8xf32>
    %107 = vector.broadcast %106 : vector<1x8xf32> to vector<16x8xf32>
    %108 = arith.addf %104, %107 : vector<16x8xf32>
    %109 = vector.shape_cast %98 : vector<16x8xf32> to vector<2x8x8xf32>
    %110 = arith.truncf %109 : vector<2x8x8xf32> to vector<2x8x8xbf16>
    %111 = vector.shape_cast %103 : vector<16x8xf32> to vector<2x8x8xf32>
    %112 = arith.truncf %111 : vector<2x8x8xf32> to vector<2x8x8xbf16>
    %113 = vector.shape_cast %108 : vector<16x8xf32> to vector<2x8x8xf32>
    %114 = arith.truncf %113 : vector<2x8x8xf32> to vector<2x8x8xbf16>
    "tpu.trace_start"() <{level = 10 : i32, message = "btd,bsd->bts"}> : () -> ()
    %cst_64 = arith.constant dense<0.000000e+00> : vector<2x8x8xf32>
    %115 = tpu.matmul %110, %112, %cst_64 {dimension_numbers = #tpu.dot_dimension_numbers<[2], [2], [1], [1], [0, 0, 0, 1, 1, 1], [0], [0]>} : vector<2x8x8xbf16>, vector<2x8x8xbf16>, vector<2x8x8xf32> -> vector<2x8x8xf32>
    "tpu.trace_stop"() : () -> ()
    %116 = arith.addf %115, %35 : vector<2x8x8xf32>
    %cst_65 = arith.constant dense<0xFF800000> : vector<2x8xf32>
    %117 = vector.multi_reduction <maximumf>, %116, %cst_65 [2] : vector<2x8x8xf32> to vector<2x8xf32>
    %118 = vector.shape_cast %117 : vector<2x8xf32> to vector<2x8x1xf32>
    %119 = vector.broadcast %118 : vector<2x8x1xf32> to vector<2x8x8xf32>
    %120 = arith.subf %116, %119 : vector<2x8x8xf32>
    %121 = math.exp %120 : vector<2x8x8xf32>
    %cst_66 = arith.constant dense<0.000000e+00> : vector<2x8xf32>
    %122 = vector.multi_reduction <add>, %121, %cst_66 [2] : vector<2x8x8xf32> to vector<2x8xf32>
    %123 = vector.shape_cast %122 : vector<2x8xf32> to vector<2x8x1xf32>
    %124 = tpu.reciprocal %123 {approx = true} : vector<2x8x1xf32> -> vector<2x8x1xf32>
    %125 = vector.broadcast %124 : vector<2x8x1xf32> to vector<2x8x8xf32>
    %126 = arith.mulf %121, %125 : vector<2x8x8xf32>
    %127 = arith.truncf %126 : vector<2x8x8xf32> to vector<2x8x8xbf16>
    "tpu.trace_start"() <{level = 10 : i32, message = "bts,bsd->btd"}> : () -> ()
    %cst_67 = arith.constant dense<0.000000e+00> : vector<2x8x8xf32>
    %128 = tpu.matmul %127, %114, %cst_67 {dimension_numbers = #tpu.dot_dimension_numbers<[2], [1], [1], [2], [0, 0, 0, 1, 1, 2], [0], [0]>} : vector<2x8x8xbf16>, vector<2x8x8xbf16>, vector<2x8x8xf32> -> vector<2x8x8xf32>
    "tpu.trace_stop"() : () -> ()
    %129 = vector.shape_cast %128 : vector<2x8x8xf32> to vector<16x8xf32>
    %130 = arith.truncf %129 : vector<16x8xf32> to vector<16x8xbf16>
    %c1_68 = arith.constant 1 : index
    %c0_69 = arith.constant 0 : index
    %c0_70 = arith.constant 0 : index
    %131 = vector.load %arg10[%c1_68, %c0_69, %c0_70] : memref<4x8x32xbf16, #tpu.memory_space<vmem>>, vector<1x8x32xbf16>
    %132 = vector.shape_cast %131 : vector<1x8x32xbf16> to vector<8x32xbf16>
    %cst_71 = arith.constant dense<0.000000e+00> : vector<16x32xf32>
    %133 = tpu.matmul %130, %132, %cst_71 {dimension_numbers = #tpu.dot_dimension_numbers<[1], [0], [0], [1], [0, 0, 1, 1], [], []>} : vector<16x8xbf16>, vector<8x32xbf16>, vector<16x32xf32> -> vector<16x32xf32>
    %134 = arith.addf %85, %133 : vector<16x32xf32>
    %c2 = arith.constant 2 : index
    %c0_72 = arith.constant 0 : index
    %c0_73 = arith.constant 0 : index
    %135 = vector.load %arg4[%c2, %c0_72, %c0_73] : memref<4x32x8xbf16, #tpu.memory_space<vmem>>, vector<1x32x8xbf16>
    %136 = vector.shape_cast %135 : vector<1x32x8xbf16> to vector<32x8xbf16>
    %c2_74 = arith.constant 2 : index
    %c0_75 = arith.constant 0 : index
    %c0_76 = arith.constant 0 : index
    %137 = vector.load %arg6[%c2_74, %c0_75, %c0_76] : memref<4x32x8xbf16, #tpu.memory_space<vmem>>, vector<1x32x8xbf16>
    %138 = vector.shape_cast %137 : vector<1x32x8xbf16> to vector<32x8xbf16>
    %c2_77 = arith.constant 2 : index
    %c0_78 = arith.constant 0 : index
    %c0_79 = arith.constant 0 : index
    %139 = vector.load %arg8[%c2_77, %c0_78, %c0_79] : memref<4x32x8xbf16, #tpu.memory_space<vmem>>, vector<1x32x8xbf16>
    %140 = vector.shape_cast %139 : vector<1x32x8xbf16> to vector<32x8xbf16>
    %cst_80 = arith.constant dense<0.000000e+00> : vector<16x8xf32>
    %141 = tpu.matmul %26, %136, %cst_80 {dimension_numbers = #tpu.dot_dimension_numbers<[1], [0], [0], [1], [0, 0, 1, 1], [], []>} : vector<16x32xbf16>, vector<32x8xbf16>, vector<16x8xf32> -> vector<16x8xf32>
    %c2_81 = arith.constant 2 : index
    %c0_82 = arith.constant 0 : index
    %c0_83 = arith.constant 0 : index
    %142 = vector.load %arg5[%c2_81, %c0_82, %c0_83] : memref<4x1x8xf32, #tpu.memory_space<vmem>>, vector<1x1x8xf32>
    %143 = vector.shape_cast %142 : vector<1x1x8xf32> to vector<1x8xf32>
    %144 = vector.broadcast %143 : vector<1x8xf32> to vector<16x8xf32>
    %145 = arith.addf %141, %144 : vector<16x8xf32>
    %cst_84 = arith.constant 0.353553385 : f32
    %146 = vector.broadcast %cst_84 : f32 to vector<16x8xf32>
    %147 = arith.mulf %145, %146 : vector<16x8xf32>
    %cst_85 = arith.constant dense<0.000000e+00> : vector<16x8xf32>
    %148 = tpu.matmul %26, %138, %cst_85 {dimension_numbers = #tpu.dot_dimension_numbers<[1], [0], [0], [1], [0, 0, 1, 1], [], []>} : vector<16x32xbf16>, vector<32x8xbf16>, vector<16x8xf32> -> vector<16x8xf32>
    %c2_86 = arith.constant 2 : index
    %c0_87 = arith.constant 0 : index
    %c0_88 = arith.constant 0 : index
    %149 = vector.load %arg7[%c2_86, %c0_87, %c0_88] : memref<4x1x8xf32, #tpu.memory_space<vmem>>, vector<1x1x8xf32>
    %150 = vector.shape_cast %149 : vector<1x1x8xf32> to vector<1x8xf32>
    %151 = vector.broadcast %150 : vector<1x8xf32> to vector<16x8xf32>
    %152 = arith.addf %148, %151 : vector<16x8xf32>
    %cst_89 = arith.constant dense<0.000000e+00> : vector<16x8xf32>
    %153 = tpu.matmul %26, %140, %cst_89 {dimension_numbers = #tpu.dot_dimension_numbers<[1], [0], [0], [1], [0, 0, 1, 1], [], []>} : vector<16x32xbf16>, vector<32x8xbf16>, vector<16x8xf32> -> vector<16x8xf32>
    %c2_90 = arith.constant 2 : index
    %c0_91 = arith.constant 0 : index
    %c0_92 = arith.constant 0 : index
    %154 = vector.load %arg9[%c2_90, %c0_91, %c0_92] : memref<4x1x8xf32, #tpu.memory_space<vmem>>, vector<1x1x8xf32>
    %155 = vector.shape_cast %154 : vector<1x1x8xf32> to vector<1x8xf32>
    %156 = vector.broadcast %155 : vector<1x8xf32> to vector<16x8xf32>
    %157 = arith.addf %153, %156 : vector<16x8xf32>
    %158 = vector.shape_cast %147 : vector<16x8xf32> to vector<2x8x8xf32>
    %159 = arith.truncf %158 : vector<2x8x8xf32> to vector<2x8x8xbf16>
    %160 = vector.shape_cast %152 : vector<16x8xf32> to vector<2x8x8xf32>
    %161 = arith.truncf %160 : vector<2x8x8xf32> to vector<2x8x8xbf16>
    %162 = vector.shape_cast %157 : vector<16x8xf32> to vector<2x8x8xf32>
    %163 = arith.truncf %162 : vector<2x8x8xf32> to vector<2x8x8xbf16>
    "tpu.trace_start"() <{level = 10 : i32, message = "btd,bsd->bts"}> : () -> ()
    %cst_93 = arith.constant dense<0.000000e+00> : vector<2x8x8xf32>
    %164 = tpu.matmul %159, %161, %cst_93 {dimension_numbers = #tpu.dot_dimension_numbers<[2], [2], [1], [1], [0, 0, 0, 1, 1, 1], [0], [0]>} : vector<2x8x8xbf16>, vector<2x8x8xbf16>, vector<2x8x8xf32> -> vector<2x8x8xf32>
    "tpu.trace_stop"() : () -> ()
    %165 = arith.addf %164, %35 : vector<2x8x8xf32>
    %cst_94 = arith.constant dense<0xFF800000> : vector<2x8xf32>
    %166 = vector.multi_reduction <maximumf>, %165, %cst_94 [2] : vector<2x8x8xf32> to vector<2x8xf32>
    %167 = vector.shape_cast %166 : vector<2x8xf32> to vector<2x8x1xf32>
    %168 = vector.broadcast %167 : vector<2x8x1xf32> to vector<2x8x8xf32>
    %169 = arith.subf %165, %168 : vector<2x8x8xf32>
    %170 = math.exp %169 : vector<2x8x8xf32>
    %cst_95 = arith.constant dense<0.000000e+00> : vector<2x8xf32>
    %171 = vector.multi_reduction <add>, %170, %cst_95 [2] : vector<2x8x8xf32> to vector<2x8xf32>
    %172 = vector.shape_cast %171 : vector<2x8xf32> to vector<2x8x1xf32>
    %173 = tpu.reciprocal %172 {approx = true} : vector<2x8x1xf32> -> vector<2x8x1xf32>
    %174 = vector.broadcast %173 : vector<2x8x1xf32> to vector<2x8x8xf32>
    %175 = arith.mulf %170, %174 : vector<2x8x8xf32>
    %176 = arith.truncf %175 : vector<2x8x8xf32> to vector<2x8x8xbf16>
    "tpu.trace_start"() <{level = 10 : i32, message = "bts,bsd->btd"}> : () -> ()
    %cst_96 = arith.constant dense<0.000000e+00> : vector<2x8x8xf32>
    %177 = tpu.matmul %176, %163, %cst_96 {dimension_numbers = #tpu.dot_dimension_numbers<[2], [1], [1], [2], [0, 0, 0, 1, 1, 2], [0], [0]>} : vector<2x8x8xbf16>, vector<2x8x8xbf16>, vector<2x8x8xf32> -> vector<2x8x8xf32>
    "tpu.trace_stop"() : () -> ()
    %178 = vector.shape_cast %177 : vector<2x8x8xf32> to vector<16x8xf32>
    %179 = arith.truncf %178 : vector<16x8xf32> to vector<16x8xbf16>
    %c2_97 = arith.constant 2 : index
    %c0_98 = arith.constant 0 : index
    %c0_99 = arith.constant 0 : index
    %180 = vector.load %arg10[%c2_97, %c0_98, %c0_99] : memref<4x8x32xbf16, #tpu.memory_space<vmem>>, vector<1x8x32xbf16>
    %181 = vector.shape_cast %180 : vector<1x8x32xbf16> to vector<8x32xbf16>
    %cst_100 = arith.constant dense<0.000000e+00> : vector<16x32xf32>
    %182 = tpu.matmul %179, %181, %cst_100 {dimension_numbers = #tpu.dot_dimension_numbers<[1], [0], [0], [1], [0, 0, 1, 1], [], []>} : vector<16x8xbf16>, vector<8x32xbf16>, vector<16x32xf32> -> vector<16x32xf32>
    %183 = arith.addf %134, %182 : vector<16x32xf32>
    %c3 = arith.constant 3 : index
    %c0_101 = arith.constant 0 : index
    %c0_102 = arith.constant 0 : index
    %184 = vector.load %arg4[%c3, %c0_101, %c0_102] : memref<4x32x8xbf16, #tpu.memory_space<vmem>>, vector<1x32x8xbf16>
    %185 = vector.shape_cast %184 : vector<1x32x8xbf16> to vector<32x8xbf16>
    %c3_103 = arith.constant 3 : index
    %c0_104 = arith.constant 0 : index
    %c0_105 = arith.constant 0 : index
    %186 = vector.load %arg6[%c3_103, %c0_104, %c0_105] : memref<4x32x8xbf16, #tpu.memory_space<vmem>>, vector<1x32x8xbf16>
    %187 = vector.shape_cast %186 : vector<1x32x8xbf16> to vector<32x8xbf16>
    %c3_106 = arith.constant 3 : index
    %c0_107 = arith.constant 0 : index
    %c0_108 = arith.constant 0 : index
    %188 = vector.load %arg8[%c3_106, %c0_107, %c0_108] : memref<4x32x8xbf16, #tpu.memory_space<vmem>>, vector<1x32x8xbf16>
    %189 = vector.shape_cast %188 : vector<1x32x8xbf16> to vector<32x8xbf16>
    %cst_109 = arith.constant dense<0.000000e+00> : vector<16x8xf32>
    %190 = tpu.matmul %26, %185, %cst_109 {dimension_numbers = #tpu.dot_dimension_numbers<[1], [0], [0], [1], [0, 0, 1, 1], [], []>} : vector<16x32xbf16>, vector<32x8xbf16>, vector<16x8xf32> -> vector<16x8xf32>
    %c3_110 = arith.constant 3 : index
    %c0_111 = arith.constant 0 : index
    %c0_112 = arith.constant 0 : index
    %191 = vector.load %arg5[%c3_110, %c0_111, %c0_112] : memref<4x1x8xf32, #tpu.memory_space<vmem>>, vector<1x1x8xf32>
    %192 = vector.shape_cast %191 : vector<1x1x8xf32> to vector<1x8xf32>
    %193 = vector.broadcast %192 : vector<1x8xf32> to vector<16x8xf32>
    %194 = arith.addf %190, %193 : vector<16x8xf32>
    %cst_113 = arith.constant 0.353553385 : f32
    %195 = vector.broadcast %cst_113 : f32 to vector<16x8xf32>
    %196 = arith.mulf %194, %195 : vector<16x8xf32>
    %cst_114 = arith.constant dense<0.000000e+00> : vector<16x8xf32>
    %197 = tpu.matmul %26, %187, %cst_114 {dimension_numbers = #tpu.dot_dimension_numbers<[1], [0], [0], [1], [0, 0, 1, 1], [], []>} : vector<16x32xbf16>, vector<32x8xbf16>, vector<16x8xf32> -> vector<16x8xf32>
    %c3_115 = arith.constant 3 : index
    %c0_116 = arith.constant 0 : index
    %c0_117 = arith.constant 0 : index
    %198 = vector.load %arg7[%c3_115, %c0_116, %c0_117] : memref<4x1x8xf32, #tpu.memory_space<vmem>>, vector<1x1x8xf32>
    %199 = vector.shape_cast %198 : vector<1x1x8xf32> to vector<1x8xf32>
    %200 = vector.broadcast %199 : vector<1x8xf32> to vector<16x8xf32>
    %201 = arith.addf %197, %200 : vector<16x8xf32>
    %cst_118 = arith.constant dense<0.000000e+00> : vector<16x8xf32>
    %202 = tpu.matmul %26, %189, %cst_118 {dimension_numbers = #tpu.dot_dimension_numbers<[1], [0], [0], [1], [0, 0, 1, 1], [], []>} : vector<16x32xbf16>, vector<32x8xbf16>, vector<16x8xf32> -> vector<16x8xf32>
    %c3_119 = arith.constant 3 : index
    %c0_120 = arith.constant 0 : index
    %c0_121 = arith.constant 0 : index
    %203 = vector.load %arg9[%c3_119, %c0_120, %c0_121] : memref<4x1x8xf32, #tpu.memory_space<vmem>>, vector<1x1x8xf32>
    %204 = vector.shape_cast %203 : vector<1x1x8xf32> to vector<1x8xf32>
    %205 = vector.broadcast %204 : vector<1x8xf32> to vector<16x8xf32>
    %206 = arith.addf %202, %205 : vector<16x8xf32>
    %207 = vector.shape_cast %196 : vector<16x8xf32> to vector<2x8x8xf32>
    %208 = arith.truncf %207 : vector<2x8x8xf32> to vector<2x8x8xbf16>
    %209 = vector.shape_cast %201 : vector<16x8xf32> to vector<2x8x8xf32>
    %210 = arith.truncf %209 : vector<2x8x8xf32> to vector<2x8x8xbf16>
    %211 = vector.shape_cast %206 : vector<16x8xf32> to vector<2x8x8xf32>
    %212 = arith.truncf %211 : vector<2x8x8xf32> to vector<2x8x8xbf16>
    "tpu.trace_start"() <{level = 10 : i32, message = "btd,bsd->bts"}> : () -> ()
    %cst_122 = arith.constant dense<0.000000e+00> : vector<2x8x8xf32>
    %213 = tpu.matmul %208, %210, %cst_122 {dimension_numbers = #tpu.dot_dimension_numbers<[2], [2], [1], [1], [0, 0, 0, 1, 1, 1], [0], [0]>} : vector<2x8x8xbf16>, vector<2x8x8xbf16>, vector<2x8x8xf32> -> vector<2x8x8xf32>
    "tpu.trace_stop"() : () -> ()
    %214 = arith.addf %213, %35 : vector<2x8x8xf32>
    %cst_123 = arith.constant dense<0xFF800000> : vector<2x8xf32>
    %215 = vector.multi_reduction <maximumf>, %214, %cst_123 [2] : vector<2x8x8xf32> to vector<2x8xf32>
    %216 = vector.shape_cast %215 : vector<2x8xf32> to vector<2x8x1xf32>
    %217 = vector.broadcast %216 : vector<2x8x1xf32> to vector<2x8x8xf32>
    %218 = arith.subf %214, %217 : vector<2x8x8xf32>
    %219 = math.exp %218 : vector<2x8x8xf32>
    %cst_124 = arith.constant dense<0.000000e+00> : vector<2x8xf32>
    %220 = vector.multi_reduction <add>, %219, %cst_124 [2] : vector<2x8x8xf32> to vector<2x8xf32>
    %221 = vector.shape_cast %220 : vector<2x8xf32> to vector<2x8x1xf32>
    %222 = tpu.reciprocal %221 {approx = true} : vector<2x8x1xf32> -> vector<2x8x1xf32>
    %223 = vector.broadcast %222 : vector<2x8x1xf32> to vector<2x8x8xf32>
    %224 = arith.mulf %219, %223 : vector<2x8x8xf32>
    %225 = arith.truncf %224 : vector<2x8x8xf32> to vector<2x8x8xbf16>
    "tpu.trace_start"() <{level = 10 : i32, message = "bts,bsd->btd"}> : () -> ()
    %cst_125 = arith.constant dense<0.000000e+00> : vector<2x8x8xf32>
    %226 = tpu.matmul %225, %212, %cst_125 {dimension_numbers = #tpu.dot_dimension_numbers<[2], [1], [1], [2], [0, 0, 0, 1, 1, 2], [0], [0]>} : vector<2x8x8xbf16>, vector<2x8x8xbf16>, vector<2x8x8xf32> -> vector<2x8x8xf32>
    "tpu.trace_stop"() : () -> ()
    %227 = vector.shape_cast %226 : vector<2x8x8xf32> to vector<16x8xf32>
    %228 = arith.truncf %227 : vector<16x8xf32> to vector<16x8xbf16>
    %c3_126 = arith.constant 3 : index
    %c0_127 = arith.constant 0 : index
    %c0_128 = arith.constant 0 : index
    %229 = vector.load %arg10[%c3_126, %c0_127, %c0_128] : memref<4x8x32xbf16, #tpu.memory_space<vmem>>, vector<1x8x32xbf16>
    %230 = vector.shape_cast %229 : vector<1x8x32xbf16> to vector<8x32xbf16>
    %cst_129 = arith.constant dense<0.000000e+00> : vector<16x32xf32>
    %231 = tpu.matmul %228, %230, %cst_129 {dimension_numbers = #tpu.dot_dimension_numbers<[1], [0], [0], [1], [0, 0, 1, 1], [], []>} : vector<16x8xbf16>, vector<8x32xbf16>, vector<16x32xf32> -> vector<16x32xf32>
    %232 = arith.addf %183, %231 : vector<16x32xf32>
    %233 = arith.addf %1, %232 : vector<16x32xf32>
    %c0_130 = arith.constant 0 : index
    %c0_131 = arith.constant 0 : index
    %234 = vector.load %arg11[%c0_130, %c0_131] : memref<1x32xf32, #tpu.memory_space<vmem>>, vector<1x32xf32>
    %235 = vector.broadcast %234 : vector<1x32xf32> to vector<16x32xf32>
    %236 = arith.addf %233, %235 : vector<16x32xf32>
    %c0_132 = arith.constant 0 : index
    %c0_133 = arith.constant 0 : index
    %237 = vector.load %arg12[%c0_132, %c0_133] : memref<1x32xf32, #tpu.memory_space<vmem>>, vector<1x32xf32>
    %c0_134 = arith.constant 0 : index
    %c0_135 = arith.constant 0 : index
    %238 = vector.load %arg13[%c0_134, %c0_135] : memref<1x32xf32, #tpu.memory_space<vmem>>, vector<1x32xf32>
    %cst_136 = arith.constant dense<0.000000e+00> : vector<16xf32>
    %239 = vector.multi_reduction <add>, %236, %cst_136 [1] : vector<16x32xf32> to vector<16xf32>
    %240 = vector.shape_cast %239 : vector<16xf32> to vector<16x1xf32>
    %cst_137 = arith.constant 3.200000e+01 : f32
    %241 = vector.broadcast %cst_137 : f32 to vector<16x1xf32>
    %242 = arith.divf %240, %241 : vector<16x1xf32>
    %243 = vector.broadcast %242 : vector<16x1xf32> to vector<16x32xf32>
    %244 = arith.subf %236, %243 : vector<16x32xf32>
    %245 = arith.mulf %244, %244 : vector<16x32xf32>
    %cst_138 = arith.constant dense<0.000000e+00> : vector<16xf32>
    %246 = vector.multi_reduction <add>, %245, %cst_138 [1] : vector<16x32xf32> to vector<16xf32>
    %247 = vector.shape_cast %246 : vector<16xf32> to vector<16x1xf32>
    %cst_139 = arith.constant 3.200000e+01 : f32
    %248 = vector.broadcast %cst_139 : f32 to vector<16x1xf32>
    %249 = arith.divf %247, %248 : vector<16x1xf32>
    %250 = vector.broadcast %242 : vector<16x1xf32> to vector<16x32xf32>
    %251 = arith.subf %236, %250 : vector<16x32xf32>
    %cst_140 = arith.constant 9.99999974E-6 : f32
    %252 = vector.broadcast %cst_140 : f32 to vector<16x1xf32>
    %253 = arith.addf %249, %252 : vector<16x1xf32>
    %254 = math.rsqrt %253 : vector<16x1xf32>
    %255 = vector.broadcast %254 : vector<16x1xf32> to vector<16x32xf32>
    %256 = arith.mulf %251, %255 : vector<16x32xf32>
    %257 = vector.broadcast %237 : vector<1x32xf32> to vector<16x32xf32>
    %258 = arith.mulf %256, %257 : vector<16x32xf32>
    %259 = vector.broadcast %238 : vector<1x32xf32> to vector<16x32xf32>
    %260 = arith.addf %258, %259 : vector<16x32xf32>
    %261 = arith.truncf %260 : vector<16x32xf32> to vector<16x32xbf16>
    %c0_141 = arith.constant 0 : index
    %c0_142 = arith.constant 0 : index
    %262 = vector.load %arg14[%c0_141, %c0_142] : memref<32x128xbf16, #tpu.memory_space<vmem>>, vector<32x128xbf16>
    %cst_143 = arith.constant dense<0.000000e+00> : vector<16x128xf32>
    %263 = tpu.matmul %261, %262, %cst_143 {dimension_numbers = #tpu.dot_dimension_numbers<[1], [0], [0], [1], [0, 0, 1, 1], [], []>} : vector<16x32xbf16>, vector<32x128xbf16>, vector<16x128xf32> -> vector<16x128xf32>
    %c0_144 = arith.constant 0 : index
    %c0_145 = arith.constant 0 : index
    %264 = vector.load %arg15[%c0_144, %c0_145] : memref<1x128xf32, #tpu.memory_space<vmem>>, vector<1x128xf32>
    %265 = vector.broadcast %264 : vector<1x128xf32> to vector<16x128xf32>
    %266 = arith.addf %263, %265 : vector<16x128xf32>
    %cst_146 = arith.constant 5.000000e-01 : f32
    %267 = vector.broadcast %cst_146 : f32 to vector<16x128xf32>
    %268 = arith.mulf %267, %266 : vector<16x128xf32>
    %cst_147 = arith.constant 4.471500e-02 : f32
    %269 = vector.broadcast %cst_147 : f32 to vector<16x128xf32>
    %270 = arith.mulf %269, %266 : vector<16x128xf32>
    %271 = arith.mulf %270, %266 : vector<16x128xf32>
    %272 = arith.mulf %271, %266 : vector<16x128xf32>
    %273 = arith.addf %266, %272 : vector<16x128xf32>
    %cst_148 = arith.constant 0.797884583 : f32
    %274 = vector.broadcast %cst_148 : f32 to vector<16x128xf32>
    %275 = arith.mulf %274, %273 : vector<16x128xf32>
    %276 = math.tanh %275 : vector<16x128xf32>
    %cst_149 = arith.constant 1.000000e+00 : f32
    %277 = vector.broadcast %cst_149 : f32 to vector<16x128xf32>
    %278 = arith.addf %277, %276 : vector<16x128xf32>
    %279 = arith.mulf %268, %278 : vector<16x128xf32>
    %280 = arith.truncf %279 : vector<16x128xf32> to vector<16x128xbf16>
    %c0_150 = arith.constant 0 : index
    %c0_151 = arith.constant 0 : index
    %281 = vector.load %arg16[%c0_150, %c0_151] : memref<128x32xbf16, #tpu.memory_space<vmem>>, vector<128x32xbf16>
    %cst_152 = arith.constant dense<0.000000e+00> : vector<16x32xf32>
    %282 = tpu.matmul %280, %281, %cst_152 {dimension_numbers = #tpu.dot_dimension_numbers<[1], [0], [0], [1], [0, 0, 1, 1], [], []>} : vector<16x128xbf16>, vector<128x32xbf16>, vector<16x32xf32> -> vector<16x32xf32>
    %c0_153 = arith.constant 0 : index
    %c0_154 = arith.constant 0 : index
    %283 = vector.load %arg17[%c0_153, %c0_154] : memref<1x32xf32, #tpu.memory_space<vmem>>, vector<1x32xf32>
    %284 = vector.broadcast %283 : vector<1x32xf32> to vector<16x32xf32>
    %285 = arith.addf %282, %284 : vector<16x32xf32>
    %286 = arith.addf %236, %285 : vector<16x32xf32>
    %287 = vector.shape_cast %286 : vector<16x32xf32> to vector<2x8x32xf32>
    %c0_155 = arith.constant 0 : index
    %c0_156 = arith.constant 0 : index
    %c0_157 = arith.constant 0 : index
    %288 = vector.load %arg18[%c0_155, %c0_156, %c0_157] : memref<2x8x32xf32, #tpu.memory_space<vmem>>, vector<2x8x32xf32>
    tpu.vector_store %arg18[%c0_155, %c0_156, %c0_157], %287 {strides = array<i32>} : memref<2x8x32xf32, #tpu.memory_space<vmem>>, vector<2x8x32xf32>,
    return
  }
  func.func @transform_0(%arg0: i32) -> (i32, i32, i32) {
    %c0_i32 = arith.constant 0 : i32
    %c0_i32_0 = arith.constant 0 : i32
    %c0_i32_1 = arith.constant 0 : i32
    %c0_i32_2 = arith.constant 0 : i32
    return %c0_i32, %c0_i32_0, %c0_i32_1 : i32, i32, i32
  }
  func.func @transform_1(%arg0: i32) -> (i32, i32) {
    %c0_i32 = arith.constant 0 : i32
    %c0_i32_0 = arith.constant 0 : i32
    %c0_i32_1 = arith.constant 0 : i32
    return %c0_i32, %c0_i32_0 : i32, i32
  }
  func.func @transform_2(%arg0: i32) -> (i32, i32) {
    %c0_i32 = arith.constant 0 : i32
    %c0_i32_0 = arith.constant 0 : i32
    %c0_i32_1 = arith.constant 0 : i32
    return %c0_i32, %c0_i32_0 : i32, i32
  }
  func.func @transform_3(%arg0: i32) -> (i32, i32, i32) {
    %c0_i32 = arith.constant 0 : i32
    %c0_i32_0 = arith.constant 0 : i32
    %c0_i32_1 = arith.constant 0 : i32
    %c0_i32_2 = arith.constant 0 : i32
    return %c0_i32, %c0_i32_0, %c0_i32_1 : i32, i32, i32
  }
  func.func @transform_4(%arg0: i32) -> (i32, i32, i32) {
    %c0_i32 = arith.constant 0 : i32
    %c0_i32_0 = arith.constant 0 : i32
    %c0_i32_1 = arith.constant 0 : i32
    %c0_i32_2 = arith.constant 0 : i32
    return %c0_i32, %c0_i32_0, %c0_i32_1 : i32, i32, i32
  }
  func.func @transform_5(%arg0: i32) -> (i32, i32, i32) {
    %c0_i32 = arith.constant 0 : i32
    %c0_i32_0 = arith.constant 0 : i32
    %c0_i32_1 = arith.constant 0 : i32
    %c0_i32_2 = arith.constant 0 : i32
    return %c0_i32, %c0_i32_0, %c0_i32_1 : i32, i32, i32
  }
  func.func @transform_6(%arg0: i32) -> (i32, i32, i32) {
    %c0_i32 = arith.constant 0 : i32
    %c0_i32_0 = arith.constant 0 : i32
    %c0_i32_1 = arith.constant 0 : i32
    %c0_i32_2 = arith.constant 0 : i32
    return %c0_i32, %c0_i32_0, %c0_i32_1 : i32, i32, i32
  }
  func.func @transform_7(%arg0: i32) -> (i32, i32, i32) {
    %c0_i32 = arith.constant 0 : i32
    %c0_i32_0 = arith.constant 0 : i32
    %c0_i32_1 = arith.constant 0 : i32
    %c0_i32_2 = arith.constant 0 : i32
    return %c0_i32, %c0_i32_0, %c0_i32_1 : i32, i32, i32
  }
  func.func @transform_8(%arg0: i32) -> (i32, i32, i32) {
    %c0_i32 = arith.constant 0 : i32
    %c0_i32_0 = arith.constant 0 : i32
    %c0_i32_1 = arith.constant 0 : i32
    %c0_i32_2 = arith.constant 0 : i32
    return %c0_i32, %c0_i32_0, %c0_i32_1 : i32, i32, i32
  }
  func.func @transform_9(%arg0: i32) -> (i32, i32, i32) {
    %c0_i32 = arith.constant 0 : i32
    %c0_i32_0 = arith.constant 0 : i32
    %c0_i32_1 = arith.constant 0 : i32
    %c0_i32_2 = arith.constant 0 : i32
    return %c0_i32, %c0_i32_0, %c0_i32_1 : i32, i32, i32
  }
  func.func @transform_10(%arg0: i32) -> (i32, i32) {
    %c0_i32 = arith.constant 0 : i32
    %c0_i32_0 = arith.constant 0 : i32
    %c0_i32_1 = arith.constant 0 : i32
    return %c0_i32, %c0_i32_0 : i32, i32
  }
  func.func @transform_11(%arg0: i32) -> (i32, i32) {
    %c0_i32 = arith.constant 0 : i32
    %c0_i32_0 = arith.constant 0 : i32
    %c0_i32_1 = arith.constant 0 : i32
    return %c0_i32, %c0_i32_0 : i32, i32
  }
  func.func @transform_12(%arg0: i32) -> (i32, i32) {
    %c0_i32 = arith.constant 0 : i32
    %c0_i32_0 = arith.constant 0 : i32
    %c0_i32_1 = arith.constant 0 : i32
    return %c0_i32, %c0_i32_0 : i32, i32
  }
  func.func @transform_13(%arg0: i32) -> (i32, i32) {
    %c0_i32 = arith.constant 0 : i32
    %c0_i32_0 = arith.constant 0 : i32
    %c0_i32_1 = arith.constant 0 : i32
    return %c0_i32, %c0_i32_0 : i32, i32
  }
  func.func @transform_14(%arg0: i32) -> (i32, i32) {
    %c0_i32 = arith.constant 0 : i32
    %c0_i32_0 = arith.constant 0 : i32
    %c0_i32_1 = arith.constant 0 : i32
    return %c0_i32, %c0_i32_0 : i32, i32
  }
  func.func @transform_15(%arg0: i32) -> (i32, i32) {
    %c0_i32 = arith.constant 0 : i32
    %c0_i32_0 = arith.constant 0 : i32
    %c0_i32_1 = arith.constant 0 : i32
    return %c0_i32, %c0_i32_0 : i32, i32
  }
  func.func @transform_16(%arg0: i32) -> (i32, i32) {
    %c0_i32 = arith.constant 0 : i32
    %c0_i32_0 = arith.constant 0 : i32
    %c0_i32_1 = arith.constant 0 : i32
    return %c0_i32, %c0_i32_0 : i32, i32
  }
  func.func @transform_17(%arg0: i32) -> (i32, i32, i32) {
    %c0_i32 = arith.constant 0 : i32
    %c0_i32_0 = arith.constant 0 : i32
    %c0_i32_1 = arith.constant 0 : i32
    %c0_i32_2 = arith.constant 0 : i32
    return %c0_i32, %c0_i32_0, %c0_i32_1 : i32, i32, i32
  }
}

</mosaic_0001>

<llo_original>
// kernel: tpu_custom_call.1
$region0: #{tpu_custom_call.1}
  #allocation0 [shape = 'u32[]', space=smem, size = 0x4, offset = 0x4, fixed_abs, tag = 'smem constant byte address 0x4 - core index']
  #allocation1 [shape = 'u32[144,128]{1,0:T(1,128)}', space=vmem, size = 0x12000, scoped, tag = 'internal scratch']
  %s0 = inlined_call_operand.vmem [shape: f32[2,8,32], index: 0, kind: input, shape index: {}]
  %s1 = inlined_call_operand.vmem [shape: f32[1,32], index: 1, kind: input, shape index: {}]
  %s2 = inlined_call_operand.vmem [shape: f32[1,32], index: 2, kind: input, shape index: {}]
  %s3 = inlined_call_operand.vmem [shape: bf16[4,32,8], index: 3, kind: input, shape index: {}]
  %s4 = inlined_call_operand.vmem [shape: f32[4,1,8], index: 4, kind: input, shape index: {}]
  %s5 = inlined_call_operand.vmem [shape: bf16[4,32,8], index: 5, kind: input, shape index: {}]
  %s6 = inlined_call_operand.vmem [shape: f32[4,1,8], index: 6, kind: input, shape index: {}]
  %s7 = inlined_call_operand.vmem [shape: bf16[4,32,8], index: 7, kind: input, shape index: {}]
  %s8 = inlined_call_operand.vmem [shape: f32[4,1,8], index: 8, kind: input, shape index: {}]
  %s9 = inlined_call_operand.vmem [shape: bf16[4,8,32], index: 9, kind: input, shape index: {}]
  %s10 = inlined_call_operand.vmem [shape: f32[1,32], index: 10, kind: input, shape index: {}]
  %s11 = inlined_call_operand.vmem [shape: f32[1,32], index: 11, kind: input, shape index: {}]
  %s12 = inlined_call_operand.vmem [shape: f32[1,32], index: 12, kind: input, shape index: {}]
  %s13 = inlined_call_operand.vmem [shape: bf16[32,128], index: 13, kind: input, shape index: {}]
  %s14 = inlined_call_operand.vmem [shape: f32[1,128], index: 14, kind: input, shape index: {}]
  %s15 = inlined_call_operand.vmem [shape: bf16[128,32], index: 15, kind: input, shape index: {}]
  %s16 = inlined_call_operand.vmem [shape: f32[1,32], index: 16, kind: input, shape index: {}]
  %s17 = inlined_call_operand.hbm [shape: f32[2,8,32], index: 17, kind: output, shape index: {}]
  %s18 = sld [smem:[#allocation0]]
  $region78: #{tpu_custom_call.1} parent=0
    _
  %s20 = ssub.s32 1, %s18
  %s21 = scalar_select 0, %s20, %s18
  $region1: #{tpu_custom_call.1} parent=0
    #allocation2 [shape = 'u8[8192]{0}', space=vmem, size = 0x2000, scoped, tag = 'output window, operand 0, single buffered']
    #allocation3 [shape = 's32[1]{0}', space=sflag, size = 0x4, scoped, tag = 'scoped memory for tpu_custom_call.1']
    %22 = vsyncpa [#allocation3], 0
    // Predicated region
    $region2: #{tpu_custom_call.1} parent=1 // pred_check
      _
    $region3: #{tpu_custom_call.1} parent=1 // pred_check_branch
      %24 = sbr.rel (0) target = $region5
    $region4: #{tpu_custom_call.1} parent=1 // pred_region
      _
    $region5: #{tpu_custom_call.1} parent=1 // pred_fallthru
      _
    // Predicated region
    $region6: #{tpu_custom_call.1} parent=1 // pred_check
      _
    $region7: #{tpu_custom_call.1} parent=1 // pred_check_branch
      %26 = sbr.rel (0) target = $region9
    $region8: #{tpu_custom_call.1} parent=1 // pred_region
      _
    $region9: #{tpu_custom_call.1} parent=1 // pred_fallthru
      _
    // Predicated region
    $region10: #{tpu_custom_call.1} parent=1 // pred_check
      _
    $region11: #{tpu_custom_call.1} parent=1 // pred_check_branch
      %28 = sbr.rel (0) target = $region13
    $region12: #{tpu_custom_call.1} parent=1 // pred_region
      _
    $region13: #{tpu_custom_call.1} parent=1 // pred_fallthru
      _
    // Predicated region
    $region14: #{tpu_custom_call.1} parent=1 // pred_check
      _
    $region15: #{tpu_custom_call.1} parent=1 // pred_check_branch
      %30 = sbr.rel (0) target = $region17
    $region16: #{tpu_custom_call.1} parent=1 // pred_region
      _
    $region17: #{tpu_custom_call.1} parent=1 // pred_fallthru
      _
    // Predicated region
    $region18: #{tpu_custom_call.1} parent=1 // pred_check
      _
    $region19: #{tpu_custom_call.1} parent=1 // pred_check_branch
      %32 = sbr.rel (0) target = $region21
    $region20: #{tpu_custom_call.1} parent=1 // pred_region
      _
    $region21: #{tpu_custom_call.1} parent=1 // pred_fallthru
      _
    // Predicated region
    $region22: #{tpu_custom_call.1} parent=1 // pred_check
      _
    $region23: #{tpu_custom_call.1} parent=1 // pred_check_branch
      %34 = sbr.rel (0) target = $region25
    $region24: #{tpu_custom_call.1} parent=1 // pred_region
      _
    $region25: #{tpu_custom_call.1} parent=1 // pred_fallthru
      _
    // Predicated region
    $region26: #{tpu_custom_call.1} parent=1 // pred_check
      _
    $region27: #{tpu_custom_call.1} parent=1 // pred_check_branch
      %36 = sbr.rel (0) target = $region29
    $region28: #{tpu_custom_call.1} parent=1 // pred_region
      _
    $region29: #{tpu_custom_call.1} parent=1 // pred_fallthru
      _
    // Predicated region
    $region30: #{tpu_custom_call.1} parent=1 // pred_check
      _
    $region31: #{tpu_custom_call.1} parent=1 // pred_check_branch
      %38 = sbr.rel (0) target = $region33
    $region32: #{tpu_custom_call.1} parent=1 // pred_region
      _
    $region33: #{tpu_custom_call.1} parent=1 // pred_fallthru
      _
    // Predicated region
    $region34: #{tpu_custom_call.1} parent=1 // pred_check
      _
    $region35: #{tpu_custom_call.1} parent=1 // pred_check_branch
      %40 = sbr.rel (0) target = $region37
    $region36: #{tpu_custom_call.1} parent=1 // pred_region
      _
    $region37: #{tpu_custom_call.1} parent=1 // pred_fallthru
      _
    // Predicated region
    $region38: #{tpu_custom_call.1} parent=1 // pred_check
      _
    $region39: #{tpu_custom_call.1} parent=1 // pred_check_branch
      %42 = sbr.rel (0) target = $region41
    $region40: #{tpu_custom_call.1} parent=1 // pred_region
      _
    $region41: #{tpu_custom_call.1} parent=1 // pred_fallthru
      _
    // Predicated region
    $region42: #{tpu_custom_call.1} parent=1 // pred_check
      _
    $region43: #{tpu_custom_call.1} parent=1 // pred_check_branch
      %44 = sbr.rel (0) target = $region45
    $region44: #{tpu_custom_call.1} parent=1 // pred_region
      _
    $region45: #{tpu_custom_call.1} parent=1 // pred_fallthru
      _
    // Predicated region
    $region46: #{tpu_custom_call.1} parent=1 // pred_check
      _
    $region47: #{tpu_custom_call.1} parent=1 // pred_check_branch
      %46 = sbr.rel (0) target = $region49
    $region48: #{tpu_custom_call.1} parent=1 // pred_region
      _
    $region49: #{tpu_custom_call.1} parent=1 // pred_fallthru
      _
    // Predicated region
    $region50: #{tpu_custom_call.1} parent=1 // pred_check
      _
    $region51: #{tpu_custom_call.1} parent=1 // pred_check_branch
      %48 = sbr.rel (0) target = $region53
    $region52: #{tpu_custom_call.1} parent=1 // pred_region
      _
    $region53: #{tpu_custom_call.1} parent=1 // pred_fallthru
      _
    // Predicated region
    $region54: #{tpu_custom_call.1} parent=1 // pred_check
      _
    $region55: #{tpu_custom_call.1} parent=1 // pred_check_branch
      %50 = sbr.rel (0) target = $region57
    $region56: #{tpu_custom_call.1} parent=1 // pred_region
      _
    $region57: #{tpu_custom_call.1} parent=1 // pred_fallthru
      _
    // Predicated region
    $region58: #{tpu_custom_call.1} parent=1 // pred_check
      _
    $region59: #{tpu_custom_call.1} parent=1 // pred_check_branch
      %52 = sbr.rel (0) target = $region61
    $region60: #{tpu_custom_call.1} parent=1 // pred_region
      _
    $region61: #{tpu_custom_call.1} parent=1 // pred_fallthru
      _
    // Predicated region
    $region62: #{tpu_custom_call.1} parent=1 // pred_check
      _
    $region63: #{tpu_custom_call.1} parent=1 // pred_check_branch
      %54 = sbr.rel (0) target = $region65
    $region64: #{tpu_custom_call.1} parent=1 // pred_region
      _
    $region65: #{tpu_custom_call.1} parent=1 // pred_fallthru
      _
    // Predicated region
    $region66: #{tpu_custom_call.1} parent=1 // pred_check
      _
    $region67: #{tpu_custom_call.1} parent=1 // pred_check_branch
      %56 = sbr.rel (0) target = $region69
    $region68: #{tpu_custom_call.1} parent=1 // pred_region
      _
    $region69: #{tpu_custom_call.1} parent=1 // pred_fallthru
      _
    %v58 = vld [vmem:[%s0] sm:$0xff]
    %v59 = vld [vmem:[%s0 + $0x8] sm:$0xff]
    %v60 = vld [vmem:[%s1] sm:$0x1]
    %v61 = vld [vmem:[%s2] sm:$0x1]
    %vm62 = vcmask 261120
    %v63 = vsel %vm62, %v58, 0.0
    %64 = vadd.xlane.f32.xlu0 %v63
    %v65 = vpop.xlane.xlu0 %64
    %v66 = vsel %vm62, %v59, 0.0
    %67 = vadd.xlane.f32.xlu0 %v66
    %v68 = vpop.xlane.xlu0 %67
    %v69 = vrcp.pop 32.0
    %v70 = vmul.f32 %v65, %v69
    %v71 = vmul.f32 %v68, %v69
    %v72 = vsub.f32 %v58, %v70
    %v73 = vsub.f32 %v59, %v71
    %v74 = vmul.f32 %v72, %v72
    %v75 = vmul.f32 %v73, %v73
    %v76 = vsel %vm62, %v74, 0.0
    %77 = vadd.xlane.f32.xlu0 %v76
    %v78 = vpop.xlane.xlu0 %77
    %v79 = vsel %vm62, %v75, 0.0
    %80 = vadd.xlane.f32.xlu0 %v79
    %v81 = vpop.xlane.xlu0 %80
    %v82 = vmul.f32 %v78, %v69
    %v83 = vmul.f32 %v81, %v69
    %v84 = vadd.f32 %v82, 1e-05
    %v85 = vadd.f32 %v83, 1e-05
    %v86 = vrsqrt.pop %v84
    %v87 = vrsqrt.pop %v85
    %v88 = vmul.f32 %v72, %v86
    %v89 = vmul.f32 %v73, %v87
    %v91 = vlaneseq
    %v92 = vshrl.u32 %v91, 7
    %v93 = vsub.s32 0, %v92
    %v94 = vrot.slane %v60, %v93
    %v96 = vmul.f32 %v88, %v94
    %v97 = vmul.f32 %v89, %v94
    %v99 = vlaneseq
    %v100 = vshrl.u32 %v99, 7
    %v101 = vsub.s32 0, %v100
    %v102 = vrot.slane %v61, %v101
    %v104 = vadd.f32 %v96, %v102
    %v105 = vadd.f32 %v97, %v102
    %v106 = vpack.c.bf16 %v105, %v104
    %v107 = vlaneseq
    %v108 = vshrl.u32 %v107, 7
    %v109 = vlaneseq
    %v110 = vand.u32 %v109, 127
    %vm111 = vcmp.le.s32.totalorder %v110, %v108
    %v112 = vsel %vm111, 0.0, -1e+30
    %v113 = vld [vmem:[%s3] sm:$0xf]
    %v114 = vld [vmem:[%s3 + $0x4] sm:$0xf]
    %v115 = vld [vmem:[%s3 + $0x8] sm:$0xf]
    %v116 = vld [vmem:[%s3 + $0xc] sm:$0xf]
    %v117 = vld [vmem:[%s5] sm:$0xf]
    %v118 = vld [vmem:[%s5 + $0x4] sm:$0xf]
    %v119 = vld [vmem:[%s5 + $0x8] sm:$0xf]
    %v120 = vld [vmem:[%s5 + $0xc] sm:$0xf]
    %v121 = vld [vmem:[%s7] sm:$0xf]
    %v122 = vld [vmem:[%s7 + $0x4] sm:$0xf]
    %v123 = vld [vmem:[%s7 + $0x8] sm:$0xf]
    %v124 = vld [vmem:[%s7 + $0xc] sm:$0xf]
    %v125 = vld [vmem:[%s4] sm:$0x1]
    %v127 = vlaneseq
    %v128 = vshrl.u32 %v127, 7
    %v129 = vsub.s32 0, %v128
    %v130 = vrot.slane %v125, %v129
    %v136 = vunpack.c.l.b16 %v113
    %v137 = vunpack.c.l.b16 %v114
    %v138 = vunpack.c.l.b16 %v115
    %v139 = vunpack.c.l.b16 %v116
    %v140 = vpack.c.b16 %v137, %v136
    %v141 = vpack.c.b16 %v139, %v138
    %v145 = vsel %vm62, %v106, 0
    %147 = vmatprep.subr.bf16.mxu0 0
    %148 = vmatpush1.bf16.msra.mxu0 0
    %149 = vmatprep.subr.bf16.mxu0 0
    %150 = vmatpush1.bf16.msra.mxu0 0
    %151 = vmatprep.subr.bf16.mxu0 0
    %152 = vmatpush1.bf16.msra.mxu0 0
    %153 = vmatprep.subr.bf16.mxu0 0
    %154 = vmatpush1.bf16.msra.mxu0 0
    %155 = vmatprep.subr.bf16.mxu0 0
    %156 = vmatpush1.bf16.msra.mxu0 0
    %157 = vmatprep.subr.bf16.mxu0 0
    %158 = vmatpush1.bf16.msra.mxu0 0
    %159 = vmatprep.subr.bf16.mxu0 0
    %160 = vmatpush1.bf16.msra.mxu0 %v141
    %161 = vmatprep.subr.bf16.mxu0 0
    %162 = vmatpush1.bf16.msra.mxu0 %v140
    %163 = vmatprep.subr.bf16.mxu0 0
    %164 = vmatpush2.bf16.msra.mxu0 0
    %165 = vmatprep.subr.bf16.mxu0 0
    %166 = vmatpush2.bf16.msra.mxu0 0
    %167 = vmatprep.subr.bf16.mxu0 0
    %168 = vmatpush2.bf16.msra.mxu0 0
    %169 = vmatprep.subr.bf16.mxu0 0
    %170 = vmatpush2.bf16.msra.mxu0 0
    %171 = vmatprep.subr.bf16.mxu0 0
    %172 = vmatpush2.bf16.msra.mxu0 0
    %173 = vmatprep.subr.bf16.mxu0 0
    %174 = vmatpush2.bf16.msra.mxu0 0
    %175 = vmatprep.subr.bf16.mxu0 0
    %176 = vmatpush2.bf16.msra.mxu0 0
    %177 = vmatprep.subr.bf16.mxu0 0
    %178 = vmatpush2.bf16.msra.mxu0 0
    %179 = vmatprep.mubr.bf16.mxu0 0
    %180 = vmatmul.mubr.bf16.gmra.mxu0 %v145
    %v181 = vpop.f32.mrf.mxu0
    %v182 = vadd.f32 %v130, %v181
    %v183 = vpop.f32.mrf.mxu0
    %v184 = vpop.f32.mrf.mxu0
    %v185 = vadd.f32 %v130, %v184
    %v186 = vpop.f32.mrf.mxu0
    %187 = vdwg.mxu0
    %v188 = vmul.f32 %v182, 0.35355338
    %v189 = vmul.f32 %v185, 0.35355338
    %v190 = vld [vmem:[%s6] sm:$0x1]
    %v192 = vlaneseq
    %v193 = vshrl.u32 %v192, 7
    %v194 = vsub.s32 0, %v193
    %v195 = vrot.slane %v190, %v194
    %v201 = vunpack.c.l.b16 %v117
    %v202 = vunpack.c.l.b16 %v118
    %v203 = vunpack.c.l.b16 %v119
    %v204 = vunpack.c.l.b16 %v120
    %v205 = vpack.c.b16 %v202, %v201
    %v206 = vpack.c.b16 %v204, %v203
    %209 = vmatprep.subr.bf16.mxu0 0
    %210 = vmatpush1.bf16.msra.mxu0 0
    %211 = vmatprep.subr.bf16.mxu0 0
    %212 = vmatpush1.bf16.msra.mxu0 0
    %213 = vmatprep.subr.bf16.mxu0 0
    %214 = vmatpush1.bf16.msra.mxu0 0
    %215 = vmatprep.subr.bf16.mxu0 0
    %216 = vmatpush1.bf16.msra.mxu0 0
    %217 = vmatprep.subr.bf16.mxu0 0
    %218 = vmatpush1.bf16.msra.mxu0 0
    %219 = vmatprep.subr.bf16.mxu0 0
    %220 = vmatpush1.bf16.msra.mxu0 0
    %221 = vmatprep.subr.bf16.mxu0 0
    %222 = vmatpush1.bf16.msra.mxu0 %v206
    %223 = vmatprep.subr.bf16.mxu0 0
    %224 = vmatpush1.bf16.msra.mxu0 %v205
    %225 = vmatprep.subr.bf16.mxu0 0
    %226 = vmatpush2.bf16.msra.mxu0 0
    %227 = vmatprep.subr.bf16.mxu0 0
    %228 = vmatpush2.bf16.msra.mxu0 0
    %229 = vmatprep.subr.bf16.mxu0 0
    %230 = vmatpush2.bf16.msra.mxu0 0
    %231 = vmatprep.subr.bf16.mxu0 0
    %232 = vmatpush2.bf16.msra.mxu0 0
    %233 = vmatprep.subr.bf16.mxu0 0
    %234 = vmatpush2.bf16.msra.mxu0 0
    %235 = vmatprep.subr.bf16.mxu0 0
    %236 = vmatpush2.bf16.msra.mxu0 0
    %237 = vmatprep.subr.bf16.mxu0 0
    %238 = vmatpush2.bf16.msra.mxu0 0
    %239 = vmatprep.subr.bf16.mxu0 0
    %240 = vmatpush2.bf16.msra.mxu0 0
    %241 = vmatprep.mubr.bf16.mxu0 0
    %242 = vmatmul.mubr.bf16.gmra.mxu0 %v145
    %v243 = vpop.f32.mrf.mxu0
    %v244 = vadd.f32 %v195, %v243
    %v245 = vpop.f32.mrf.mxu0
    %v246 = vpop.f32.mrf.mxu0
    %v247 = vadd.f32 %v195, %v246
    %v248 = vpop.f32.mrf.mxu0
    %249 = vdwg.mxu0
    %v250 = vld [vmem:[%s8] sm:$0x1]
    %v252 = vlaneseq
    %v253 = vshrl.u32 %v252, 7
    %v254 = vsub.s32 0, %v253
    %v255 = vrot.slane %v250, %v254
    %v261 = vunpack.c.l.b16 %v121
    %v262 = vunpack.c.l.b16 %v122
    %v263 = vunpack.c.l.b16 %v123
    %v264 = vunpack.c.l.b16 %v124
    %v265 = vpack.c.b16 %v262, %v261
    %v266 = vpack.c.b16 %v264, %v263
    %269 = vmatprep.subr.bf16.mxu0 0
    %270 = vmatpush1.bf16.msra.mxu0 0
    %271 = vmatprep.subr.bf16.mxu0 0
    %272 = vmatpush1.bf16.msra.mxu0 0
    %273 = vmatprep.subr.bf16.mxu0 0
    %274 = vmatpush1.bf16.msra.mxu0 0
    %275 = vmatprep.subr.bf16.mxu0 0
    %276 = vmatpush1.bf16.msra.mxu0 0
    %277 = vmatprep.subr.bf16.mxu0 0
    %278 = vmatpush1.bf16.msra.mxu0 0
    %279 = vmatprep.subr.bf16.mxu0 0
    %280 = vmatpush1.bf16.msra.mxu0 0
    %281 = vmatprep.subr.bf16.mxu0 0
    %282 = vmatpush1.bf16.msra.mxu0 %v266
    %283 = vmatprep.subr.bf16.mxu0 0
    %284 = vmatpush1.bf16.msra.mxu0 %v265
    %285 = vmatprep.subr.bf16.mxu0 0
    %286 = vmatpush2.bf16.msra.mxu0 0
    %287 = vmatprep.subr.bf16.mxu0 0
    %288 = vmatpush2.bf16.msra.mxu0 0
    %289 = vmatprep.subr.bf16.mxu0 0
    %290 = vmatpush2.bf16.msra.mxu0 0
    %291 = vmatprep.subr.bf16.mxu0 0
    %292 = vmatpush2.bf16.msra.mxu0 0
    %293 = vmatprep.subr.bf16.mxu0 0
    %294 = vmatpush2.bf16.msra.mxu0 0
    %295 = vmatprep.subr.bf16.mxu0 0
    %296 = vmatpush2.bf16.msra.mxu0 0
    %297 = vmatprep.subr.bf16.mxu0 0
    %298 = vmatpush2.bf16.msra.mxu0 0
    %299 = vmatprep.subr.bf16.mxu0 0
    %300 = vmatpush2.bf16.msra.mxu0 0
    %301 = vmatprep.mubr.bf16.mxu0 0
    %302 = vmatmul.mubr.bf16.gmra.mxu0 %v145
    %v303 = vpop.f32.mrf.mxu0
    %v304 = vadd.f32 %v255, %v303
    %v305 = vpop.f32.mrf.mxu0
    %v306 = vpop.f32.mrf.mxu0
    %v307 = vadd.f32 %v255, %v306
    %v308 = vpop.f32.mrf.mxu0
    %309 = vdwg.mxu0
    %v310 = vpack.c.bf16 %v188, %v188
    %v311 = vpack.c.bf16 %v189, %v189
    %v312 = vpack.c.bf16 %v244, %v244
    %v313 = vpack.c.bf16 %v247, %v247
    %v314 = vpack.c.bf16 %v304, %v304
    %v315 = vpack.c.bf16 %v307, %v307
    %vm316 = vcmask 64512
    %v318 = vsel %vm316, %v310, 0
    %v321 = vsel %vm316, %v312, 0
    %323 = vmatprep.subr.bf16.mxu0 0
    %324 = vmatpush1.bf16.xpose.msra.mxu0 0
    %325 = vmatprep.subr.bf16.mxu0 0
    %326 = vmatpush1.bf16.xpose.msra.mxu0 0
    %327 = vmatprep.subr.bf16.mxu0 0
    %328 = vmatpush1.bf16.xpose.msra.mxu0 0
    %329 = vmatprep.subr.bf16.mxu0 0
    %330 = vmatpush1.bf16.xpose.msra.mxu0 0
    %331 = vmatprep.subr.bf16.mxu0 0
    %332 = vmatpush1.bf16.xpose.msra.mxu0 0
    %333 = vmatprep.subr.bf16.mxu0 0
    %334 = vmatpush1.bf16.xpose.msra.mxu0 0
    %335 = vmatprep.subr.bf16.mxu0 0
    %336 = vmatpush1.bf16.xpose.msra.mxu0 0
    %337 = vmatprep.subr.bf16.mxu0 0
    %338 = vmatpush1.bf16.xpose.msra.mxu0 %v321
    %339 = vmatprep.subr.bf16.mxu0 0
    %340 = vmatpush2.bf16.xpose.msra.mxu0 0
    %341 = vmatprep.subr.bf16.mxu0 0
    %342 = vmatpush2.bf16.xpose.msra.mxu0 0
    %343 = vmatprep.subr.bf16.mxu0 0
    %344 = vmatpush2.bf16.xpose.msra.mxu0 0
    %345 = vmatprep.subr.bf16.mxu0 0
    %346 = vmatpush2.bf16.xpose.msra.mxu0 0
    %347 = vmatprep.subr.bf16.mxu0 0
    %348 = vmatpush2.bf16.xpose.msra.mxu0 0
    %349 = vmatprep.subr.bf16.mxu0 0
    %350 = vmatpush2.bf16.xpose.msra.mxu0 0
    %351 = vmatprep.subr.bf16.mxu0 0
    %352 = vmatpush2.bf16.xpose.msra.mxu0 0
    %353 = vmatprep.subr.bf16.mxu0 0
    %354 = vmatpush2.bf16.xpose.msra.mxu0 0
    %355 = vmatprep.mubr.bf16.mxu0 0
    %356 = vmatmul.mubr.bf16.gmra.mxu0 %v318
    %v357 = vpop.f32.mrf.mxu0
    %v358 = vadd.f32 %v112, %v357
    %v359 = vpop.f32.mrf.mxu0
    %v360 = vpop.f32.mrf.mxu0
    %v361 = vpop.f32.mrf.mxu0
    %362 = vdwg.mxu0
    %v364 = vsel %vm316, %v311, 0
    %v367 = vsel %vm316, %v313, 0
    %369 = vmatprep.subr.bf16.mxu0 0
    %370 = vmatpush1.bf16.xpose.msra.mxu0 0
    %371 = vmatprep.subr.bf16.mxu0 0
    %372 = vmatpush1.bf16.xpose.msra.mxu0 0
    %373 = vmatprep.subr.bf16.mxu0 0
    %374 = vmatpush1.bf16.xpose.msra.mxu0 0
    %375 = vmatprep.subr.bf16.mxu0 0
    %376 = vmatpush1.bf16.xpose.msra.mxu0 0
    %377 = vmatprep.subr.bf16.mxu0 0
    %378 = vmatpush1.bf16.xpose.msra.mxu0 0
    %379 = vmatprep.subr.bf16.mxu0 0
    %380 = vmatpush1.bf16.xpose.msra.mxu0 0
    %381 = vmatprep.subr.bf16.mxu0 0
    %382 = vmatpush1.bf16.xpose.msra.mxu0 0
    %383 = vmatprep.subr.bf16.mxu0 0
    %384 = vmatpush1.bf16.xpose.msra.mxu0 %v367
    %385 = vmatprep.subr.bf16.mxu0 0
    %386 = vmatpush2.bf16.xpose.msra.mxu0 0
    %387 = vmatprep.subr.bf16.mxu0 0
    %388 = vmatpush2.bf16.xpose.msra.mxu0 0
    %389 = vmatprep.subr.bf16.mxu0 0
    %390 = vmatpush2.bf16.xpose.msra.mxu0 0
    %391 = vmatprep.subr.bf16.mxu0 0
    %392 = vmatpush2.bf16.xpose.msra.mxu0 0
    %393 = vmatprep.subr.bf16.mxu0 0
    %394 = vmatpush2.bf16.xpose.msra.mxu0 0
    %395 = vmatprep.subr.bf16.mxu0 0
    %396 = vmatpush2.bf16.xpose.msra.mxu0 0
    %397 = vmatprep.subr.bf16.mxu0 0
    %398 = vmatpush2.bf16.xpose.msra.mxu0 0
    %399 = vmatprep.subr.bf16.mxu0 0
    %400 = vmatpush2.bf16.xpose.msra.mxu0 0
    %401 = vmatprep.mubr.bf16.mxu0 0
    %402 = vmatmul.mubr.bf16.gmra.mxu0 %v364
    %v403 = vpop.f32.mrf.mxu0
    %v404 = vadd.f32 %v112, %v403
    %v405 = vpop.f32.mrf.mxu0
    %v406 = vpop.f32.mrf.mxu0
    %v407 = vpop.f32.mrf.mxu0
    %408 = vdwg.mxu0
    %v409 = vsel %vm316, %v358, -inf
    %410 = vmax.xlane.f32.xlu0 %v409
    %v411 = vpop.xlane.xlu0 %410
    %v412 = vsel %vm316, %v404, -inf
    %413 = vmax.xlane.f32.xlu0 %v412
    %v414 = vpop.xlane.xlu0 %413
    %v415 = vsub.f32 %v358, %v411
    %v416 = vsub.f32 %v404, %v414
    %v417 = vmul.f32 %v415, 1.442695
    %v418 = vpow.pop %v417
    %v419 = vmul.f32 %v416, 1.442695
    %v420 = vpow.pop %v419
    %v421 = vsel %vm316, %v418, 0.0
    %422 = vadd.xlane.f32.xlu0 %v421
    %v423 = vpop.xlane.xlu0 %422
    %v424 = vsel %vm316, %v420, 0.0
    %425 = vadd.xlane.f32.xlu0 %v424
    %v426 = vpop.xlane.xlu0 %425
    %v427 = vrcp.pop %v423
    %v428 = vrcp.pop %v426
    %v429 = vmul.f32 %v418, %v427
    %v430 = vmul.f32 %v420, %v428
    %v431 = vpack.c.bf16 %v429, %v429
    %v432 = vpack.c.bf16 %v430, %v430
    %v434 = vsel %vm316, %v431, 0
    %vm436 = vcmask 1043456
    %v438 = vsel %vm436, %v314, 0
    %440 = vmatprep.subr.bf16.mxu0 0
    %441 = vmatpush1.bf16.msra.mxu0 0
    %442 = vmatprep.subr.bf16.mxu0 0
    %443 = vmatpush1.bf16.msra.mxu0 0
    %444 = vmatprep.subr.bf16.mxu0 0
    %445 = vmatpush1.bf16.msra.mxu0 0
    %446 = vmatprep.subr.bf16.mxu0 0
    %447 = vmatpush1.bf16.msra.mxu0 0
    %448 = vmatprep.subr.bf16.mxu0 0
    %449 = vmatpush1.bf16.msra.mxu0 0
    %450 = vmatprep.subr.bf16.mxu0 0
    %451 = vmatpush1.bf16.msra.mxu0 0
    %452 = vmatprep.subr.bf16.mxu0 0
    %453 = vmatpush1.bf16.msra.mxu0 0
    %454 = vmatprep.subr.bf16.mxu0 0
    %455 = vmatpush1.bf16.msra.mxu0 %v438
    %456 = vmatprep.subr.bf16.mxu0 0
    %457 = vmatpush2.bf16.msra.mxu0 0
    %458 = vmatprep.subr.bf16.mxu0 0
    %459 = vmatpush2.bf16.msra.mxu0 0
    %460 = vmatprep.subr.bf16.mxu0 0
    %461 = vmatpush2.bf16.msra.mxu0 0
    %462 = vmatprep.subr.bf16.mxu0 0
    %463 = vmatpush2.bf16.msra.mxu0 0
    %464 = vmatprep.subr.bf16.mxu0 0
    %465 = vmatpush2.bf16.msra.mxu0 0
    %466 = vmatprep.subr.bf16.mxu0 0
    %467 = vmatpush2.bf16.msra.mxu0 0
    %468 = vmatprep.subr.bf16.mxu0 0
    %469 = vmatpush2.bf16.msra.mxu0 0
    %470 = vmatprep.subr.bf16.mxu0 0
    %471 = vmatpush2.bf16.msra.mxu0 0
    %472 = vmatprep.mubr.bf16.mxu0 0
    %473 = vmatmul.mubr.bf16.gmra.mxu0 %v434
    %v474 = vpop.f32.mrf.mxu0
    %v475 = vadd.f32 0.0, %v474
    %v476 = vpop.f32.mrf.mxu0
    %v477 = vpop.f32.mrf.mxu0
    %v478 = vpop.f32.mrf.mxu0
    %479 = vdwg.mxu0
    %v481 = vsel %vm316, %v432, 0
    %v484 = vsel %vm436, %v315, 0
    %486 = vmatprep.subr.bf16.mxu0 0
    %487 = vmatpush1.bf16.msra.mxu0 0
    %488 = vmatprep.subr.bf16.mxu0 0
    %489 = vmatpush1.bf16.msra.mxu0 0
    %490 = vmatprep.subr.bf16.mxu0 0
    %491 = vmatpush1.bf16.msra.mxu0 0
    %492 = vmatprep.subr.bf16.mxu0 0
    %493 = vmatpush1.bf16.msra.mxu0 0
    %494 = vmatprep.subr.bf16.mxu0 0
    %495 = vmatpush1.bf16.msra.mxu0 0
    %496 = vmatprep.subr.bf16.mxu0 0
    %497 = vmatpush1.bf16.msra.mxu0 0
    %498 = vmatprep.subr.bf16.mxu0 0
    %499 = vmatpush1.bf16.msra.mxu0 0
    %500 = vmatprep.subr.bf16.mxu0 0
    %501 = vmatpush1.bf16.msra.mxu0 %v484
    %502 = vmatprep.subr.bf16.mxu0 0
    %503 = vmatpush2.bf16.msra.mxu0 0
    %504 = vmatprep.subr.bf16.mxu0 0
    %505 = vmatpush2.bf16.msra.mxu0 0
    %506 = vmatprep.subr.bf16.mxu0 0
    %507 = vmatpush2.bf16.msra.mxu0 0
    %508 = vmatprep.subr.bf16.mxu0 0
    %509 = vmatpush2.bf16.msra.mxu0 0
    %510 = vmatprep.subr.bf16.mxu0 0
    %511 = vmatpush2.bf16.msra.mxu0 0
    %512 = vmatprep.subr.bf16.mxu0 0
    %513 = vmatpush2.bf16.msra.mxu0 0
    %514 = vmatprep.subr.bf16.mxu0 0
    %515 = vmatpush2.bf16.msra.mxu0 0
    %516 = vmatprep.subr.bf16.mxu0 0
    %517 = vmatpush2.bf16.msra.mxu0 0
    %518 = vmatprep.mubr.bf16.mxu0 0
    %519 = vmatmul.mubr.bf16.gmra.mxu0 %v481
    %v520 = vpop.f32.mrf.mxu0
    %v521 = vadd.f32 0.0, %v520
    %v522 = vpop.f32.mrf.mxu0
    %v523 = vpop.f32.mrf.mxu0
    %v524 = vpop.f32.mrf.mxu0
    %525 = vdwg.mxu0
    %v526 = vpack.c.bf16 %v521, %v475
    %v527 = vld [vmem:[%s9] sm:$0xf]
    %s528 = scalar_lea.vmem %s3, 16
    %v529 = vld [vmem:[%s528] sm:$0xf]
    %v530 = vld [vmem:[%s528 + $0x4] sm:$0xf]
    %v531 = vld [vmem:[%s528 + $0x8] sm:$0xf]
    %v532 = vld [vmem:[%s528 + $0xc] sm:$0xf]
    %s533 = scalar_lea.vmem %s5, 16
    %v534 = vld [vmem:[%s533] sm:$0xf]
    %v535 = vld [vmem:[%s533 + $0x4] sm:$0xf]
    %v536 = vld [vmem:[%s533 + $0x8] sm:$0xf]
    %v537 = vld [vmem:[%s533 + $0xc] sm:$0xf]
    %s538 = scalar_lea.vmem %s7, 16
    %v539 = vld [vmem:[%s538] sm:$0xf]
    %v540 = vld [vmem:[%s538 + $0x4] sm:$0xf]
    %v541 = vld [vmem:[%s538 + $0x8] sm:$0xf]
    %v542 = vld [vmem:[%s538 + $0xc] sm:$0xf]
    %s543 = scalar_lea.vmem %s4, 1
    %v544 = vld [vmem:[%s543] sm:$0x1]
    %v546 = vlaneseq
    %v547 = vshrl.u32 %v546, 7
    %v548 = vsub.s32 0, %v547
    %v549 = vrot.slane %v544, %v548
    %v555 = vunpack.c.l.b16 %v529
    %v556 = vunpack.c.l.b16 %v530
    %v557 = vunpack.c.l.b16 %v531
    %v558 = vunpack.c.l.b16 %v532
    %v559 = vpack.c.b16 %v556, %v555
    %v560 = vpack.c.b16 %v558, %v557
    %563 = vmatprep.subr.bf16.mxu0 0
    %564 = vmatpush1.bf16.msra.mxu0 0
    %565 = vmatprep.subr.bf16.mxu0 0
    %566 = vmatpush1.bf16.msra.mxu0 0
    %567 = vmatprep.subr.bf16.mxu0 0
    %568 = vmatpush1.bf16.msra.mxu0 0
    %569 = vmatprep.subr.bf16.mxu0 0
    %570 = vmatpush1.bf16.msra.mxu0 0
    %571 = vmatprep.subr.bf16.mxu0 0
    %572 = vmatpush1.bf16.msra.mxu0 0
    %573 = vmatprep.subr.bf16.mxu0 0
    %574 = vmatpush1.bf16.msra.mxu0 0
    %575 = vmatprep.subr.bf16.mxu0 0
    %576 = vmatpush1.bf16.msra.mxu0 %v560
    %577 = vmatprep.subr.bf16.mxu0 0
    %578 = vmatpush1.bf16.msra.mxu0 %v559
    %579 = vmatprep.subr.bf16.mxu0 0
    %580 = vmatpush2.bf16.msra.mxu0 0
    %581 = vmatprep.subr.bf16.mxu0 0
    %582 = vmatpush2.bf16.msra.mxu0 0
    %583 = vmatprep.subr.bf16.mxu0 0
    %584 = vmatpush2.bf16.msra.mxu0 0
    %585 = vmatprep.subr.bf16.mxu0 0
    %586 = vmatpush2.bf16.msra.mxu0 0
    %587 = vmatprep.subr.bf16.mxu0 0
    %588 = vmatpush2.bf16.msra.mxu0 0
    %589 = vmatprep.subr.bf16.mxu0 0
    %590 = vmatpush2.bf16.msra.mxu0 0
    %591 = vmatprep.subr.bf16.mxu0 0
    %592 = vmatpush2.bf16.msra.mxu0 0
    %593 = vmatprep.subr.bf16.mxu0 0
    %594 = vmatpush2.bf16.msra.mxu0 0
    %595 = vmatprep.mubr.bf16.mxu0 0
    %596 = vmatmul.mubr.bf16.gmra.mxu0 %v145
    %v597 = vpop.f32.mrf.mxu0
    %v598 = vadd.f32 %v549, %v597
    %v599 = vpop.f32.mrf.mxu0
    %v600 = vpop.f32.mrf.mxu0
    %v601 = vadd.f32 %v549, %v600
    %v602 = vpop.f32.mrf.mxu0
    %603 = vdwg.mxu0
    %v604 = vmul.f32 %v598, 0.35355338
    %v605 = vmul.f32 %v601, 0.35355338
    %s606 = scalar_lea.vmem %s6, 1
    %v607 = vld [vmem:[%s606] sm:$0x1]
    %v609 = vlaneseq
    %v610 = vshrl.u32 %v609, 7
    %v611 = vsub.s32 0, %v610
    %v612 = vrot.slane %v607, %v611
    %v618 = vunpack.c.l.b16 %v534
    %v619 = vunpack.c.l.b16 %v535
    %v620 = vunpack.c.l.b16 %v536
    %v621 = vunpack.c.l.b16 %v537
    %v622 = vpack.c.b16 %v619, %v618
    %v623 = vpack.c.b16 %v621, %v620
    %626 = vmatprep.subr.bf16.mxu0 0
    %627 = vmatpush1.bf16.msra.mxu0 0
    %628 = vmatprep.subr.bf16.mxu0 0
    %629 = vmatpush1.bf16.msra.mxu0 0
    %630 = vmatprep.subr.bf16.mxu0 0
    %631 = vmatpush1.bf16.msra.mxu0 0
    %632 = vmatprep.subr.bf16.mxu0 0
    %633 = vmatpush1.bf16.msra.mxu0 0
    %634 = vmatprep.subr.bf16.mxu0 0
    %635 = vmatpush1.bf16.msra.mxu0 0
    %636 = vmatprep.subr.bf16.mxu0 0
    %637 = vmatpush1.bf16.msra.mxu0 0
    %638 = vmatprep.subr.bf16.mxu0 0
    %639 = vmatpush1.bf16.msra.mxu0 %v623
    %640 = vmatprep.subr.bf16.mxu0 0
    %641 = vmatpush1.bf16.msra.mxu0 %v622
    %642 = vmatprep.subr.bf16.mxu0 0
    %643 = vmatpush2.bf16.msra.mxu0 0
    %644 = vmatprep.subr.bf16.mxu0 0
    %645 = vmatpush2.bf16.msra.mxu0 0
    %646 = vmatprep.subr.bf16.mxu0 0
    %647 = vmatpush2.bf16.msra.mxu0 0
    %648 = vmatprep.subr.bf16.mxu0 0
    %649 = vmatpush2.bf16.msra.mxu0 0
    %650 = vmatprep.subr.bf16.mxu0 0
    %651 = vmatpush2.bf16.msra.mxu0 0
    %652 = vmatprep.subr.bf16.mxu0 0
    %653 = vmatpush2.bf16.msra.mxu0 0
    %654 = vmatprep.subr.bf16.mxu0 0
    %655 = vmatpush2.bf16.msra.mxu0 0
    %656 = vmatprep.subr.bf16.mxu0 0
    %657 = vmatpush2.bf16.msra.mxu0 0
    %658 = vmatprep.mubr.bf16.mxu0 0
    %659 = vmatmul.mubr.bf16.gmra.mxu0 %v145
    %v660 = vpop.f32.mrf.mxu0
    %v661 = vadd.f32 %v612, %v660
    %v662 = vpop.f32.mrf.mxu0
    %v663 = vpop.f32.mrf.mxu0
    %v664 = vadd.f32 %v612, %v663
    %v665 = vpop.f32.mrf.mxu0
    %666 = vdwg.mxu0
    %s667 = scalar_lea.vmem %s8, 1
    %v668 = vld [vmem:[%s667] sm:$0x1]
    %v670 = vlaneseq
    %v671 = vshrl.u32 %v670, 7
    %v672 = vsub.s32 0, %v671
    %v673 = vrot.slane %v668, %v672
    %v679 = vunpack.c.l.b16 %v539
    %v680 = vunpack.c.l.b16 %v540
    %v681 = vunpack.c.l.b16 %v541
    %v682 = vunpack.c.l.b16 %v542
    %v683 = vpack.c.b16 %v680, %v679
    %v684 = vpack.c.b16 %v682, %v681
    %687 = vmatprep.subr.bf16.mxu0 0
    %688 = vmatpush1.bf16.msra.mxu0 0
    %689 = vmatprep.subr.bf16.mxu0 0
    %690 = vmatpush1.bf16.msra.mxu0 0
    %691 = vmatprep.subr.bf16.mxu0 0
    %692 = vmatpush1.bf16.msra.mxu0 0
    %693 = vmatprep.subr.bf16.mxu0 0
    %694 = vmatpush1.bf16.msra.mxu0 0
    %695 = vmatprep.subr.bf16.mxu0 0
    %696 = vmatpush1.bf16.msra.mxu0 0
    %697 = vmatprep.subr.bf16.mxu0 0
    %698 = vmatpush1.bf16.msra.mxu0 0
    %699 = vmatprep.subr.bf16.mxu0 0
    %700 = vmatpush1.bf16.msra.mxu0 %v684
    %701 = vmatprep.subr.bf16.mxu0 0
    %702 = vmatpush1.bf16.msra.mxu0 %v683
    %703 = vmatprep.subr.bf16.mxu0 0
    %704 = vmatpush2.bf16.msra.mxu0 0
    %705 = vmatprep.subr.bf16.mxu0 0
    %706 = vmatpush2.bf16.msra.mxu0 0
    %707 = vmatprep.subr.bf16.mxu0 0
    %708 = vmatpush2.bf16.msra.mxu0 0
    %709 = vmatprep.subr.bf16.mxu0 0
    %710 = vmatpush2.bf16.msra.mxu0 0
    %711 = vmatprep.subr.bf16.mxu0 0
    %712 = vmatpush2.bf16.msra.mxu0 0
    %713 = vmatprep.subr.bf16.mxu0 0
    %714 = vmatpush2.bf16.msra.mxu0 0
    %715 = vmatprep.subr.bf16.mxu0 0
    %716 = vmatpush2.bf16.msra.mxu0 0
    %717 = vmatprep.subr.bf16.mxu0 0
    %718 = vmatpush2.bf16.msra.mxu0 0
    %719 = vmatprep.mubr.bf16.mxu0 0
    %720 = vmatmul.mubr.bf16.gmra.mxu0 %v145
    %v721 = vpop.f32.mrf.mxu0
    %v722 = vadd.f32 %v673, %v721
    %v723 = vpop.f32.mrf.mxu0
    %v724 = vpop.f32.mrf.mxu0
    %v725 = vadd.f32 %v673, %v724
    %v726 = vpop.f32.mrf.mxu0
    %727 = vdwg.mxu0
    %v728 = vpack.c.bf16 %v604, %v604
    %v729 = vpack.c.bf16 %v605, %v605
    %v730 = vpack.c.bf16 %v661, %v661
    %v731 = vpack.c.bf16 %v664, %v664
    %v732 = vpack.c.bf16 %v722, %v722
    %v733 = vpack.c.bf16 %v725, %v725
    %v735 = vsel %vm316, %v728, 0
    %v738 = vsel %vm316, %v730, 0
    %740 = vmatprep.subr.bf16.mxu0 0
    %741 = vmatpush1.bf16.xpose.msra.mxu0 0
    %742 = vmatprep.subr.bf16.mxu0 0
    %743 = vmatpush1.bf16.xpose.msra.mxu0 0
    %744 = vmatprep.subr.bf16.mxu0 0
    %745 = vmatpush1.bf16.xpose.msra.mxu0 0
    %746 = vmatprep.subr.bf16.mxu0 0
    %747 = vmatpush1.bf16.xpose.msra.mxu0 0
    %748 = vmatprep.subr.bf16.mxu0 0
    %749 = vmatpush1.bf16.xpose.msra.mxu0 0
    %750 = vmatprep.subr.bf16.mxu0 0
    %751 = vmatpush1.bf16.xpose.msra.mxu0 0
    %752 = vmatprep.subr.bf16.mxu0 0
    %753 = vmatpush1.bf16.xpose.msra.mxu0 0
    %754 = vmatprep.subr.bf16.mxu0 0
    %755 = vmatpush1.bf16.xpose.msra.mxu0 %v738
    %756 = vmatprep.subr.bf16.mxu0 0
    %757 = vmatpush2.bf16.xpose.msra.mxu0 0
    %758 = vmatprep.subr.bf16.mxu0 0
    %759 = vmatpush2.bf16.xpose.msra.mxu0 0
    %760 = vmatprep.subr.bf16.mxu0 0
    %761 = vmatpush2.bf16.xpose.msra.mxu0 0
    %762 = vmatprep.subr.bf16.mxu0 0
    %763 = vmatpush2.bf16.xpose.msra.mxu0 0
    %764 = vmatprep.subr.bf16.mxu0 0
    %765 = vmatpush2.bf16.xpose.msra.mxu0 0
    %766 = vmatprep.subr.bf16.mxu0 0
    %767 = vmatpush2.bf16.xpose.msra.mxu0 0
    %768 = vmatprep.subr.bf16.mxu0 0
    %769 = vmatpush2.bf16.xpose.msra.mxu0 0
    %770 = vmatprep.subr.bf16.mxu0 0
    %771 = vmatpush2.bf16.xpose.msra.mxu0 0
    %772 = vmatprep.mubr.bf16.mxu0 0
    %773 = vmatmul.mubr.bf16.gmra.mxu0 %v735
    %v774 = vpop.f32.mrf.mxu0
    %v775 = vadd.f32 %v112, %v774
    %v776 = vpop.f32.mrf.mxu0
    %v777 = vpop.f32.mrf.mxu0
    %v778 = vpop.f32.mrf.mxu0
    %779 = vdwg.mxu0
    %v781 = vsel %vm316, %v729, 0
    %v784 = vsel %vm316, %v731, 0
    %786 = vmatprep.subr.bf16.mxu0 0
    %787 = vmatpush1.bf16.xpose.msra.mxu0 0
    %788 = vmatprep.subr.bf16.mxu0 0
    %789 = vmatpush1.bf16.xpose.msra.mxu0 0
    %790 = vmatprep.subr.bf16.mxu0 0
    %791 = vmatpush1.bf16.xpose.msra.mxu0 0
    %792 = vmatprep.subr.bf16.mxu0 0
    %793 = vmatpush1.bf16.xpose.msra.mxu0 0
    %794 = vmatprep.subr.bf16.mxu0 0
    %795 = vmatpush1.bf16.xpose.msra.mxu0 0
    %796 = vmatprep.subr.bf16.mxu0 0
    %797 = vmatpush1.bf16.xpose.msra.mxu0 0
    %798 = vmatprep.subr.bf16.mxu0 0
    %799 = vmatpush1.bf16.xpose.msra.mxu0 0
    %800 = vmatprep.subr.bf16.mxu0 0
    %801 = vmatpush1.bf16.xpose.msra.mxu0 %v784
    %802 = vmatprep.subr.bf16.mxu0 0
    %803 = vmatpush2.bf16.xpose.msra.mxu0 0
    %804 = vmatprep.subr.bf16.mxu0 0
    %805 = vmatpush2.bf16.xpose.msra.mxu0 0
    %806 = vmatprep.subr.bf16.mxu0 0
    %807 = vmatpush2.bf16.xpose.msra.mxu0 0
    %808 = vmatprep.subr.bf16.mxu0 0
    %809 = vmatpush2.bf16.xpose.msra.mxu0 0
    %810 = vmatprep.subr.bf16.mxu0 0
    %811 = vmatpush2.bf16.xpose.msra.mxu0 0
    %812 = vmatprep.subr.bf16.mxu0 0
    %813 = vmatpush2.bf16.xpose.msra.mxu0 0
    %814 = vmatprep.subr.bf16.mxu0 0
    %815 = vmatpush2.bf16.xpose.msra.mxu0 0
    %816 = vmatprep.subr.bf16.mxu0 0
    %817 = vmatpush2.bf16.xpose.msra.mxu0 0
    %818 = vmatprep.mubr.bf16.mxu0 0
    %819 = vmatmul.mubr.bf16.gmra.mxu0 %v781
    %v820 = vpop.f32.mrf.mxu0
    %v821 = vadd.f32 %v112, %v820
    %v822 = vpop.f32.mrf.mxu0
    %v823 = vpop.f32.mrf.mxu0
    %v824 = vpop.f32.mrf.mxu0
    %825 = vdwg.mxu0
    %v826 = vsel %vm316, %v775, -inf
    %827 = vmax.xlane.f32.xlu0 %v826
    %v828 = vpop.xlane.xlu0 %827
    %v829 = vsel %vm316, %v821, -inf
    %830 = vmax.xlane.f32.xlu0 %v829
    %v831 = vpop.xlane.xlu0 %830
    %v832 = vsub.f32 %v775, %v828
    %v833 = vsub.f32 %v821, %v831
    %v834 = vmul.f32 %v832, 1.442695
    %v835 = vpow.pop %v834
    %v836 = vmul.f32 %v833, 1.442695
    %v837 = vpow.pop %v836
    %v838 = vsel %vm316, %v835, 0.0
    %839 = vadd.xlane.f32.xlu0 %v838
    %v840 = vpop.xlane.xlu0 %839
    %v841 = vsel %vm316, %v837, 0.0
    %842 = vadd.xlane.f32.xlu0 %v841
    %v843 = vpop.xlane.xlu0 %842
    %v844 = vrcp.pop %v840
    %v845 = vrcp.pop %v843
    %v846 = vmul.f32 %v835, %v844
    %v847 = vmul.f32 %v837, %v845
    %v848 = vpack.c.bf16 %v846, %v846
    %v849 = vpack.c.bf16 %v847, %v847
    %v851 = vsel %vm316, %v848, 0
    %v854 = vsel %vm436, %v732, 0
    %856 = vmatprep.subr.bf16.mxu0 0
    %857 = vmatpush1.bf16.msra.mxu0 0
    %858 = vmatprep.subr.bf16.mxu0 0
    %859 = vmatpush1.bf16.msra.mxu0 0
    %860 = vmatprep.subr.bf16.mxu0 0
    %861 = vmatpush1.bf16.msra.mxu0 0
    %862 = vmatprep.subr.bf16.mxu0 0
    %863 = vmatpush1.bf16.msra.mxu0 0
    %864 = vmatprep.subr.bf16.mxu0 0
    %865 = vmatpush1.bf16.msra.mxu0 0
    %866 = vmatprep.subr.bf16.mxu0 0
    %867 = vmatpush1.bf16.msra.mxu0 0
    %868 = vmatprep.subr.bf16.mxu0 0
    %869 = vmatpush1.bf16.msra.mxu0 0
    %870 = vmatprep.subr.bf16.mxu0 0
    %871 = vmatpush1.bf16.msra.mxu0 %v854
    %872 = vmatprep.subr.bf16.mxu0 0
    %873 = vmatpush2.bf16.msra.mxu0 0
    %874 = vmatprep.subr.bf16.mxu0 0
    %875 = vmatpush2.bf16.msra.mxu0 0
    %876 = vmatprep.subr.bf16.mxu0 0
    %877 = vmatpush2.bf16.msra.mxu0 0
    %878 = vmatprep.subr.bf16.mxu0 0
    %879 = vmatpush2.bf16.msra.mxu0 0
    %880 = vmatprep.subr.bf16.mxu0 0
    %881 = vmatpush2.bf16.msra.mxu0 0
    %882 = vmatprep.subr.bf16.mxu0 0
    %883 = vmatpush2.bf16.msra.mxu0 0
    %884 = vmatprep.subr.bf16.mxu0 0
    %885 = vmatpush2.bf16.msra.mxu0 0
    %886 = vmatprep.subr.bf16.mxu0 0
    %887 = vmatpush2.bf16.msra.mxu0 0
    %888 = vmatprep.mubr.bf16.mxu0 0
    %889 = vmatmul.mubr.bf16.gmra.mxu0 %v851
    %v890 = vpop.f32.mrf.mxu0
    %v891 = vadd.f32 0.0, %v890
    %v892 = vpop.f32.mrf.mxu0
    %v893 = vpop.f32.mrf.mxu0
    %v894 = vpop.f32.mrf.mxu0
    %895 = vdwg.mxu0
    %v897 = vsel %vm316, %v849, 0
    %v900 = vsel %vm436, %v733, 0
    %902 = vmatprep.subr.bf16.mxu0 0
    %903 = vmatpush1.bf16.msra.mxu0 0
    %904 = vmatprep.subr.bf16.mxu0 0
    %905 = vmatpush1.bf16.msra.mxu0 0
    %906 = vmatprep.subr.bf16.mxu0 0
    %907 = vmatpush1.bf16.msra.mxu0 0
    %908 = vmatprep.subr.bf16.mxu0 0
    %909 = vmatpush1.bf16.msra.mxu0 0
    %910 = vmatprep.subr.bf16.mxu0 0
    %911 = vmatpush1.bf16.msra.mxu0 0
    %912 = vmatprep.subr.bf16.mxu0 0
    %913 = vmatpush1.bf16.msra.mxu0 0
    %914 = vmatprep.subr.bf16.mxu0 0
    %915 = vmatpush1.bf16.msra.mxu0 0
    %916 = vmatprep.subr.bf16.mxu0 0
    %917 = vmatpush1.bf16.msra.mxu0 %v900
    %918 = vmatprep.subr.bf16.mxu0 0
    %919 = vmatpush2.bf16.msra.mxu0 0
    %920 = vmatprep.subr.bf16.mxu0 0
    %921 = vmatpush2.bf16.msra.mxu0 0
    %922 = vmatprep.subr.bf16.mxu0 0
    %923 = vmatpush2.bf16.msra.mxu0 0
    %924 = vmatprep.subr.bf16.mxu0 0
    %925 = vmatpush2.bf16.msra.mxu0 0
    %926 = vmatprep.subr.bf16.mxu0 0
    %927 = vmatpush2.bf16.msra.mxu0 0
    %928 = vmatprep.subr.bf16.mxu0 0
    %929 = vmatpush2.bf16.msra.mxu0 0
    %930 = vmatprep.subr.bf16.mxu0 0
    %931 = vmatpush2.bf16.msra.mxu0 0
    %932 = vmatprep.subr.bf16.mxu0 0
    %933 = vmatpush2.bf16.msra.mxu0 0
    %934 = vmatprep.mubr.bf16.mxu0 0
    %935 = vmatmul.mubr.bf16.gmra.mxu0 %v897
    %v936 = vpop.f32.mrf.mxu0
    %v937 = vadd.f32 0.0, %v936
    %v938 = vpop.f32.mrf.mxu0
    %v939 = vpop.f32.mrf.mxu0
    %v940 = vpop.f32.mrf.mxu0
    %941 = vdwg.mxu0
    %v942 = vpack.c.bf16 %v937, %v891
    %s943 = scalar_lea.vmem %s9, 4
    %v944 = vld [vmem:[%s943] sm:$0xf]
    %v946 = vsel %vm316, %v942, 0
    %v949 = vsel %vm436, %v944, 0
    %951 = vmatprep.subr.bf16.mxu0 0
    %952 = vmatpush1.bf16.msra.mxu0 0
    %953 = vmatprep.subr.bf16.mxu0 0
    %954 = vmatpush1.bf16.msra.mxu0 0
    %955 = vmatprep.subr.bf16.mxu0 0
    %956 = vmatpush1.bf16.msra.mxu0 0
    %957 = vmatprep.subr.bf16.mxu0 0
    %958 = vmatpush1.bf16.msra.mxu0 0
    %959 = vmatprep.subr.bf16.mxu0 0
    %960 = vmatpush1.bf16.msra.mxu0 0
    %961 = vmatprep.subr.bf16.mxu0 0
    %962 = vmatpush1.bf16.msra.mxu0 0
    %963 = vmatprep.subr.bf16.mxu0 0
    %964 = vmatpush1.bf16.msra.mxu0 0
    %965 = vmatprep.subr.bf16.mxu0 0
    %966 = vmatpush1.bf16.msra.mxu0 %v949
    %967 = vmatprep.subr.bf16.mxu0 0
    %968 = vmatpush2.bf16.msra.mxu0 0
    %969 = vmatprep.subr.bf16.mxu0 0
    %970 = vmatpush2.bf16.msra.mxu0 0
    %971 = vmatprep.subr.bf16.mxu0 0
    %972 = vmatpush2.bf16.msra.mxu0 0
    %973 = vmatprep.subr.bf16.mxu0 0
    %974 = vmatpush2.bf16.msra.mxu0 0
    %975 = vmatprep.subr.bf16.mxu0 0
    %976 = vmatpush2.bf16.msra.mxu0 0
    %977 = vmatprep.subr.bf16.mxu0 0
    %978 = vmatpush2.bf16.msra.mxu0 0
    %979 = vmatprep.subr.bf16.mxu0 0
    %980 = vmatpush2.bf16.msra.mxu0 0
    %981 = vmatprep.subr.bf16.mxu0 0
    %982 = vmatpush2.bf16.msra.mxu0 0
    %983 = vmatprep.mubr.bf16.mxu0 0
    %984 = vmatmul.mubr.bf16.gmra.mxu0 %v946
    %v985 = vpop.f32.mrf.mxu0
    %v986 = vadd.f32 0.0, %v985
    %v987 = vpop.f32.mrf.mxu0
    %v988 = vpop.f32.mrf.mxu0
    %v989 = vadd.f32 0.0, %v988
    %v990 = vpop.f32.mrf.mxu0
    %991 = vdwg.mxu0
    %v993 = vsel %vm316, %v526, 0
    %v996 = vsel %vm436, %v527, 0
    %998 = vmatprep.subr.bf16.mxu0 0
    %999 = vmatpush1.bf16.msra.mxu0 0
    %1000 = vmatprep.subr.bf16.mxu0 0
    %1001 = vmatpush1.bf16.msra.mxu0 0
    %1002 = vmatprep.subr.bf16.mxu0 0
    %1003 = vmatpush1.bf16.msra.mxu0 0
    %1004 = vmatprep.subr.bf16.mxu0 0
    %1005 = vmatpush1.bf16.msra.mxu0 0
    %1006 = vmatprep.subr.bf16.mxu0 0
    %1007 = vmatpush1.bf16.msra.mxu0 0
    %1008 = vmatprep.subr.bf16.mxu0 0
    %1009 = vmatpush1.bf16.msra.mxu0 0
    %1010 = vmatprep.subr.bf16.mxu0 0
    %1011 = vmatpush1.bf16.msra.mxu0 0
    %1012 = vmatprep.subr.bf16.mxu0 0
    %1013 = vmatpush1.bf16.msra.mxu0 %v996
    %1014 = vmatprep.subr.bf16.mxu0 0
    %1015 = vmatpush2.bf16.msra.mxu0 0
    %1016 = vmatprep.subr.bf16.mxu0 0
    %1017 = vmatpush2.bf16.msra.mxu0 0
    %1018 = vmatprep.subr.bf16.mxu0 0
    %1019 = vmatpush2.bf16.msra.mxu0 0
    %1020 = vmatprep.subr.bf16.mxu0 0
    %1021 = vmatpush2.bf16.msra.mxu0 0
    %1022 = vmatprep.subr.bf16.mxu0 0
    %1023 = vmatpush2.bf16.msra.mxu0 0
    %1024 = vmatprep.subr.bf16.mxu0 0
    %1025 = vmatpush2.bf16.msra.mxu0 0
    %1026 = vmatprep.subr.bf16.mxu0 0
    %1027 = vmatpush2.bf16.msra.mxu0 0
    %1028 = vmatprep.subr.bf16.mxu0 0
    %1029 = vmatpush2.bf16.msra.mxu0 0
    %1030 = vmatprep.mubr.bf16.mxu0 0
    %1031 = vmatmul.mubr.bf16.gmra.mxu0 %v993
    %v1032 = vpop.f32.mrf.mxu0
    %v1033 = vadd.f32 %v986, %v1032
    %v1034 = vpop.f32.mrf.mxu0
    %v1035 = vpop.f32.mrf.mxu0
    %v1036 = vadd.f32 %v989, %v1035
    %v1037 = vpop.f32.mrf.mxu0
    %1038 = vdwg.mxu0
    %s1039 = scalar_lea.vmem %s3, 32
    %v1040 = vld [vmem:[%s1039] sm:$0xf]
    %v1041 = vld [vmem:[%s1039 + $0x4] sm:$0xf]
    %v1042 = vld [vmem:[%s1039 + $0x8] sm:$0xf]
    %v1043 = vld [vmem:[%s1039 + $0xc] sm:$0xf]
    %s1044 = scalar_lea.vmem %s5, 32
    %v1045 = vld [vmem:[%s1044] sm:$0xf]
    %v1046 = vld [vmem:[%s1044 + $0x4] sm:$0xf]
    %v1047 = vld [vmem:[%s1044 + $0x8] sm:$0xf]
    %v1048 = vld [vmem:[%s1044 + $0xc] sm:$0xf]
    %s1049 = scalar_lea.vmem %s7, 32
    %v1050 = vld [vmem:[%s1049] sm:$0xf]
    %v1051 = vld [vmem:[%s1049 + $0x4] sm:$0xf]
    %v1052 = vld [vmem:[%s1049 + $0x8] sm:$0xf]
    %v1053 = vld [vmem:[%s1049 + $0xc] sm:$0xf]
    %s1054 = scalar_lea.vmem %s4, 2
    %v1055 = vld [vmem:[%s1054] sm:$0x1]
    %v1057 = vlaneseq
    %v1058 = vshrl.u32 %v1057, 7
    %v1059 = vsub.s32 0, %v1058
    %v1060 = vrot.slane %v1055, %v1059
    %v1066 = vunpack.c.l.b16 %v1040
    %v1067 = vunpack.c.l.b16 %v1041
    %v1068 = vunpack.c.l.b16 %v1042
    %v1069 = vunpack.c.l.b16 %v1043
    %v1070 = vpack.c.b16 %v1067, %v1066
    %v1071 = vpack.c.b16 %v1069, %v1068
    %1074 = vmatprep.subr.bf16.mxu0 0
    %1075 = vmatpush1.bf16.msra.mxu0 0
    %1076 = vmatprep.subr.bf16.mxu0 0
    %1077 = vmatpush1.bf16.msra.mxu0 0
    %1078 = vmatprep.subr.bf16.mxu0 0
    %1079 = vmatpush1.bf16.msra.mxu0 0
    %1080 = vmatprep.subr.bf16.mxu0 0
    %1081 = vmatpush1.bf16.msra.mxu0 0
    %1082 = vmatprep.subr.bf16.mxu0 0
    %1083 = vmatpush1.bf16.msra.mxu0 0
    %1084 = vmatprep.subr.bf16.mxu0 0
    %1085 = vmatpush1.bf16.msra.mxu0 0
    %1086 = vmatprep.subr.bf16.mxu0 0
    %1087 = vmatpush1.bf16.msra.mxu0 %v1071
    %1088 = vmatprep.subr.bf16.mxu0 0
    %1089 = vmatpush1.bf16.msra.mxu0 %v1070
    %1090 = vmatprep.subr.bf16.mxu0 0
    %1091 = vmatpush2.bf16.msra.mxu0 0
    %1092 = vmatprep.subr.bf16.mxu0 0
    %1093 = vmatpush2.bf16.msra.mxu0 0
    %1094 = vmatprep.subr.bf16.mxu0 0
    %1095 = vmatpush2.bf16.msra.mxu0 0
    %1096 = vmatprep.subr.bf16.mxu0 0
    %1097 = vmatpush2.bf16.msra.mxu0 0
    %1098 = vmatprep.subr.bf16.mxu0 0
    %1099 = vmatpush2.bf16.msra.mxu0 0
    %1100 = vmatprep.subr.bf16.mxu0 0
    %1101 = vmatpush2.bf16.msra.mxu0 0
    %1102 = vmatprep.subr.bf16.mxu0 0
    %1103 = vmatpush2.bf16.msra.mxu0 0
    %1104 = vmatprep.subr.bf16.mxu0 0
    %1105 = vmatpush2.bf16.msra.mxu0 0
    %1106 = vmatprep.mubr.bf16.mxu0 0
    %1107 = vmatmul.mubr.bf16.gmra.mxu0 %v145
    %v1108 = vpop.f32.mrf.mxu0
    %v1109 = vadd.f32 %v1060, %v1108
    %v1110 = vpop.f32.mrf.mxu0
    %v1111 = vpop.f32.mrf.mxu0
    %v1112 = vadd.f32 %v1060, %v1111
    %v1113 = vpop.f32.mrf.mxu0
    %1114 = vdwg.mxu0
    %v1115 = vmul.f32 %v1109, 0.35355338
    %v1116 = vmul.f32 %v1112, 0.35355338
    %s1117 = scalar_lea.vmem %s6, 2
    %v1118 = vld [vmem:[%s1117] sm:$0x1]
    %v1120 = vlaneseq
    %v1121 = vshrl.u32 %v1120, 7
    %v1122 = vsub.s32 0, %v1121
    %v1123 = vrot.slane %v1118, %v1122
    %v1129 = vunpack.c.l.b16 %v1045
    %v1130 = vunpack.c.l.b16 %v1046
    %v1131 = vunpack.c.l.b16 %v1047
    %v1132 = vunpack.c.l.b16 %v1048
    %v1133 = vpack.c.b16 %v1130, %v1129
    %v1134 = vpack.c.b16 %v1132, %v1131
    %1137 = vmatprep.subr.bf16.mxu0 0
    %1138 = vmatpush1.bf16.msra.mxu0 0
    %1139 = vmatprep.subr.bf16.mxu0 0
    %1140 = vmatpush1.bf16.msra.mxu0 0
    %1141 = vmatprep.subr.bf16.mxu0 0
    %1142 = vmatpush1.bf16.msra.mxu0 0
    %1143 = vmatprep.subr.bf16.mxu0 0
    %1144 = vmatpush1.bf16.msra.mxu0 0
    %1145 = vmatprep.subr.bf16.mxu0 0
    %1146 = vmatpush1.bf16.msra.mxu0 0
    %1147 = vmatprep.subr.bf16.mxu0 0
    %1148 = vmatpush1.bf16.msra.mxu0 0
    %1149 = vmatprep.subr.bf16.mxu0 0
    %1150 = vmatpush1.bf16.msra.mxu0 %v1134
    %1151 = vmatprep.subr.bf16.mxu0 0
    %1152 = vmatpush1.bf16.msra.mxu0 %v1133
    %1153 = vmatprep.subr.bf16.mxu0 0
    %1154 = vmatpush2.bf16.msra.mxu0 0
    %1155 = vmatprep.subr.bf16.mxu0 0
    %1156 = vmatpush2.bf16.msra.mxu0 0
    %1157 = vmatprep.subr.bf16.mxu0 0
    %1158 = vmatpush2.bf16.msra.mxu0 0
    %1159 = vmatprep.subr.bf16.mxu0 0
    %1160 = vmatpush2.bf16.msra.mxu0 0
    %1161 = vmatprep.subr.bf16.mxu0 0
    %1162 = vmatpush2.bf16.msra.mxu0 0
    %1163 = vmatprep.subr.bf16.mxu0 0
    %1164 = vmatpush2.bf16.msra.mxu0 0
    %1165 = vmatprep.subr.bf16.mxu0 0
    %1166 = vmatpush2.bf16.msra.mxu0 0
    %1167 = vmatprep.subr.bf16.mxu0 0
    %1168 = vmatpush2.bf16.msra.mxu0 0
    %1169 = vmatprep.mubr.bf16.mxu0 0
    %1170 = vmatmul.mubr.bf16.gmra.mxu0 %v145
    %v1171 = vpop.f32.mrf.mxu0
    %v1172 = vadd.f32 %v1123, %v1171
    %v1173 = vpop.f32.mrf.mxu0
    %v1174 = vpop.f32.mrf.mxu0
    %v1175 = vadd.f32 %v1123, %v1174
    %v1176 = vpop.f32.mrf.mxu0
    %1177 = vdwg.mxu0
    %s1178 = scalar_lea.vmem %s8, 2
    %v1179 = vld [vmem:[%s1178] sm:$0x1]
    %v1181 = vlaneseq
    %v1182 = vshrl.u32 %v1181, 7
    %v1183 = vsub.s32 0, %v1182
    %v1184 = vrot.slane %v1179, %v1183
    %v1190 = vunpack.c.l.b16 %v1050
    %v1191 = vunpack.c.l.b16 %v1051
    %v1192 = vunpack.c.l.b16 %v1052
    %v1193 = vunpack.c.l.b16 %v1053
    %v1194 = vpack.c.b16 %v1191, %v1190
    %v1195 = vpack.c.b16 %v1193, %v1192
    %1198 = vmatprep.subr.bf16.mxu0 0
    %1199 = vmatpush1.bf16.msra.mxu0 0
    %1200 = vmatprep.subr.bf16.mxu0 0
    %1201 = vmatpush1.bf16.msra.mxu0 0
    %1202 = vmatprep.subr.bf16.mxu0 0
    %1203 = vmatpush1.bf16.msra.mxu0 0
    %1204 = vmatprep.subr.bf16.mxu0 0
    %1205 = vmatpush1.bf16.msra.mxu0 0
    %1206 = vmatprep.subr.bf16.mxu0 0
    %1207 = vmatpush1.bf16.msra.mxu0 0
    %1208 = vmatprep.subr.bf16.mxu0 0
    %1209 = vmatpush1.bf16.msra.mxu0 0
    %1210 = vmatprep.subr.bf16.mxu0 0
    %1211 = vmatpush1.bf16.msra.mxu0 %v1195
    %1212 = vmatprep.subr.bf16.mxu0 0
    %1213 = vmatpush1.bf16.msra.mxu0 %v1194
    %1214 = vmatprep.subr.bf16.mxu0 0
    %1215 = vmatpush2.bf16.msra.mxu0 0
    %1216 = vmatprep.subr.bf16.mxu0 0
    %1217 = vmatpush2.bf16.msra.mxu0 0
    %1218 = vmatprep.subr.bf16.mxu0 0
    %1219 = vmatpush2.bf16.msra.mxu0 0
    %1220 = vmatprep.subr.bf16.mxu0 0
    %1221 = vmatpush2.bf16.msra.mxu0 0
    %1222 = vmatprep.subr.bf16.mxu0 0
    %1223 = vmatpush2.bf16.msra.mxu0 0
    %1224 = vmatprep.subr.bf16.mxu0 0
    %1225 = vmatpush2.bf16.msra.mxu0 0
    %1226 = vmatprep.subr.bf16.mxu0 0
    %1227 = vmatpush2.bf16.msra.mxu0 0
    %1228 = vmatprep.subr.bf16.mxu0 0
    %1229 = vmatpush2.bf16.msra.mxu0 0
    %1230 = vmatprep.mubr.bf16.mxu0 0
    %1231 = vmatmul.mubr.bf16.gmra.mxu0 %v145
    %v1232 = vpop.f32.mrf.mxu0
    %v1233 = vadd.f32 %v1184, %v1232
    %v1234 = vpop.f32.mrf.mxu0
    %v1235 = vpop.f32.mrf.mxu0
    %v1236 = vadd.f32 %v1184, %v1235
    %v1237 = vpop.f32.mrf.mxu0
    %1238 = vdwg.mxu0
    %v1239 = vpack.c.bf16 %v1115, %v1115
    %v1240 = vpack.c.bf16 %v1116, %v1116
    %v1241 = vpack.c.bf16 %v1172, %v1172
    %v1242 = vpack.c.bf16 %v1175, %v1175
    %v1243 = vpack.c.bf16 %v1233, %v1233
    %v1244 = vpack.c.bf16 %v1236, %v1236
    %v1246 = vsel %vm316, %v1239, 0
    %v1249 = vsel %vm316, %v1241, 0
    %1251 = vmatprep.subr.bf16.mxu0 0
    %1252 = vmatpush1.bf16.xpose.msra.mxu0 0
    %1253 = vmatprep.subr.bf16.mxu0 0
    %1254 = vmatpush1.bf16.xpose.msra.mxu0 0
    %1255 = vmatprep.subr.bf16.mxu0 0
    %1256 = vmatpush1.bf16.xpose.msra.mxu0 0
    %1257 = vmatprep.subr.bf16.mxu0 0
    %1258 = vmatpush1.bf16.xpose.msra.mxu0 0
    %1259 = vmatprep.subr.bf16.mxu0 0
    %1260 = vmatpush1.bf16.xpose.msra.mxu0 0
    %1261 = vmatprep.subr.bf16.mxu0 0
    %1262 = vmatpush1.bf16.xpose.msra.mxu0 0
    %1263 = vmatprep.subr.bf16.mxu0 0
    %1264 = vmatpush1.bf16.xpose.msra.mxu0 0
    %1265 = vmatprep.subr.bf16.mxu0 0
    %1266 = vmatpush1.bf16.xpose.msra.mxu0 %v1249
    %1267 = vmatprep.subr.bf16.mxu0 0
    %1268 = vmatpush2.bf16.xpose.msra.mxu0 0
    %1269 = vmatprep.subr.bf16.mxu0 0
    %1270 = vmatpush2.bf16.xpose.msra.mxu0 0
    %1271 = vmatprep.subr.bf16.mxu0 0
    %1272 = vmatpush2.bf16.xpose.msra.mxu0 0
    %1273 = vmatprep.subr.bf16.mxu0 0
    %1274 = vmatpush2.bf16.xpose.msra.mxu0 0
    %1275 = vmatprep.subr.bf16.mxu0 0
    %1276 = vmatpush2.bf16.xpose.msra.mxu0 0
    %1277 = vmatprep.subr.bf16.mxu0 0
    %1278 = vmatpush2.bf16.xpose.msra.mxu0 0
    %1279 = vmatprep.subr.bf16.mxu0 0
    %1280 = vmatpush2.bf16.xpose.msra.mxu0 0
    %1281 = vmatprep.subr.bf16.mxu0 0
    %1282 = vmatpush2.bf16.xpose.msra.mxu0 0
    %1283 = vmatprep.mubr.bf16.mxu0 0
    %1284 = vmatmul.mubr.bf16.gmra.mxu0 %v1246
    %v1285 = vpop.f32.mrf.mxu0
    %v1286 = vadd.f32 %v112, %v1285
    %v1287 = vpop.f32.mrf.mxu0
    %v1288 = vpop.f32.mrf.mxu0
    %v1289 = vpop.f32.mrf.mxu0
    %1290 = vdwg.mxu0
    %v1292 = vsel %vm316, %v1240, 0
    %v1295 = vsel %vm316, %v1242, 0
    %1297 = vmatprep.subr.bf16.mxu0 0
    %1298 = vmatpush1.bf16.xpose.msra.mxu0 0
    %1299 = vmatprep.subr.bf16.mxu0 0
    %1300 = vmatpush1.bf16.xpose.msra.mxu0 0
    %1301 = vmatprep.subr.bf16.mxu0 0
    %1302 = vmatpush1.bf16.xpose.msra.mxu0 0
    %1303 = vmatprep.subr.bf16.mxu0 0
    %1304 = vmatpush1.bf16.xpose.msra.mxu0 0
    %1305 = vmatprep.subr.bf16.mxu0 0
    %1306 = vmatpush1.bf16.xpose.msra.mxu0 0
    %1307 = vmatprep.subr.bf16.mxu0 0
    %1308 = vmatpush1.bf16.xpose.msra.mxu0 0
    %1309 = vmatprep.subr.bf16.mxu0 0
    %1310 = vmatpush1.bf16.xpose.msra.mxu0 0
    %1311 = vmatprep.subr.bf16.mxu0 0
    %1312 = vmatpush1.bf16.xpose.msra.mxu0 %v1295
    %1313 = vmatprep.subr.bf16.mxu0 0
    %1314 = vmatpush2.bf16.xpose.msra.mxu0 0
    %1315 = vmatprep.subr.bf16.mxu0 0
    %1316 = vmatpush2.bf16.xpose.msra.mxu0 0
    %1317 = vmatprep.subr.bf16.mxu0 0
    %1318 = vmatpush2.bf16.xpose.msra.mxu0 0
    %1319 = vmatprep.subr.bf16.mxu0 0
    %1320 = vmatpush2.bf16.xpose.msra.mxu0 0
    %1321 = vmatprep.subr.bf16.mxu0 0
    %1322 = vmatpush2.bf16.xpose.msra.mxu0 0
    %1323 = vmatprep.subr.bf16.mxu0 0
    %1324 = vmatpush2.bf16.xpose.msra.mxu0 0
    %1325 = vmatprep.subr.bf16.mxu0 0
    %1326 = vmatpush2.bf16.xpose.msra.mxu0 0
    %1327 = vmatprep.subr.bf16.mxu0 0
    %1328 = vmatpush2.bf16.xpose.msra.mxu0 0
    %1329 = vmatprep.mubr.bf16.mxu0 0
    %1330 = vmatmul.mubr.bf16.gmra.mxu0 %v1292
    %v1331 = vpop.f32.mrf.mxu0
    %v1332 = vadd.f32 %v112, %v1331
    %v1333 = vpop.f32.mrf.mxu0
    %v1334 = vpop.f32.mrf.mxu0
    %v1335 = vpop.f32.mrf.mxu0
    %1336 = vdwg.mxu0
    %v1337 = vsel %vm316, %v1286, -inf
    %1338 = vmax.xlane.f32.xlu0 %v1337
    %v1339 = vpop.xlane.xlu0 %1338
    %v1340 = vsel %vm316, %v1332, -inf
    %1341 = vmax.xlane.f32.xlu0 %v1340
    %v1342 = vpop.xlane.xlu0 %1341
    %v1343 = vsub.f32 %v1286, %v1339
    %v1344 = vsub.f32 %v1332, %v1342
    %v1345 = vmul.f32 %v1343, 1.442695
    %v1346 = vpow.pop %v1345
    %v1347 = vmul.f32 %v1344, 1.442695
    %v1348 = vpow.pop %v1347
    %v1349 = vsel %vm316, %v1346, 0.0
    %1350 = vadd.xlane.f32.xlu0 %v1349
    %v1351 = vpop.xlane.xlu0 %1350
    %v1352 = vsel %vm316, %v1348, 0.0
    %1353 = vadd.xlane.f32.xlu0 %v1352
    %v1354 = vpop.xlane.xlu0 %1353
    %v1355 = vrcp.pop %v1351
    %v1356 = vrcp.pop %v1354
    %v1357 = vmul.f32 %v1346, %v1355
    %v1358 = vmul.f32 %v1348, %v1356
    %v1359 = vpack.c.bf16 %v1357, %v1357
    %v1360 = vpack.c.bf16 %v1358, %v1358
    %v1362 = vsel %vm316, %v1359, 0
    %v1365 = vsel %vm436, %v1243, 0
    %1367 = vmatprep.subr.bf16.mxu0 0
    %1368 = vmatpush1.bf16.msra.mxu0 0
    %1369 = vmatprep.subr.bf16.mxu0 0
    %1370 = vmatpush1.bf16.msra.mxu0 0
    %1371 = vmatprep.subr.bf16.mxu0 0
    %1372 = vmatpush1.bf16.msra.mxu0 0
    %1373 = vmatprep.subr.bf16.mxu0 0
    %1374 = vmatpush1.bf16.msra.mxu0 0
    %1375 = vmatprep.subr.bf16.mxu0 0
    %1376 = vmatpush1.bf16.msra.mxu0 0
    %1377 = vmatprep.subr.bf16.mxu0 0
    %1378 = vmatpush1.bf16.msra.mxu0 0
    %1379 = vmatprep.subr.bf16.mxu0 0
    %1380 = vmatpush1.bf16.msra.mxu0 0
    %1381 = vmatprep.subr.bf16.mxu0 0
    %1382 = vmatpush1.bf16.msra.mxu0 %v1365
    %1383 = vmatprep.subr.bf16.mxu0 0
    %1384 = vmatpush2.bf16.msra.mxu0 0
    %1385 = vmatprep.subr.bf16.mxu0 0
    %1386 = vmatpush2.bf16.msra.mxu0 0
    %1387 = vmatprep.subr.bf16.mxu0 0
    %1388 = vmatpush2.bf16.msra.mxu0 0
    %1389 = vmatprep.subr.bf16.mxu0 0
    %1390 = vmatpush2.bf16.msra.mxu0 0
    %1391 = vmatprep.subr.bf16.mxu0 0
    %1392 = vmatpush2.bf16.msra.mxu0 0
    %1393 = vmatprep.subr.bf16.mxu0 0
    %1394 = vmatpush2.bf16.msra.mxu0 0
    %1395 = vmatprep.subr.bf16.mxu0 0
    %1396 = vmatpush2.bf16.msra.mxu0 0
    %1397 = vmatprep.subr.bf16.mxu0 0
    %1398 = vmatpush2.bf16.msra.mxu0 0
    %1399 = vmatprep.mubr.bf16.mxu0 0
    %1400 = vmatmul.mubr.bf16.gmra.mxu0 %v1362
    %v1401 = vpop.f32.mrf.mxu0
    %v1402 = vadd.f32 0.0, %v1401
    %v1403 = vpop.f32.mrf.mxu0
    %v1404 = vpop.f32.mrf.mxu0
    %v1405 = vpop.f32.mrf.mxu0
    %1406 = vdwg.mxu0
    %v1408 = vsel %vm316, %v1360, 0
    %v1411 = vsel %vm436, %v1244, 0
    %1413 = vmatprep.subr.bf16.mxu0 0
    %1414 = vmatpush1.bf16.msra.mxu0 0
    %1415 = vmatprep.subr.bf16.mxu0 0
    %1416 = vmatpush1.bf16.msra.mxu0 0
    %1417 = vmatprep.subr.bf16.mxu0 0
    %1418 = vmatpush1.bf16.msra.mxu0 0
    %1419 = vmatprep.subr.bf16.mxu0 0
    %1420 = vmatpush1.bf16.msra.mxu0 0
    %1421 = vmatprep.subr.bf16.mxu0 0
    %1422 = vmatpush1.bf16.msra.mxu0 0
    %1423 = vmatprep.subr.bf16.mxu0 0
    %1424 = vmatpush1.bf16.msra.mxu0 0
    %1425 = vmatprep.subr.bf16.mxu0 0
    %1426 = vmatpush1.bf16.msra.mxu0 0
    %1427 = vmatprep.subr.bf16.mxu0 0
    %1428 = vmatpush1.bf16.msra.mxu0 %v1411
    %1429 = vmatprep.subr.bf16.mxu0 0
    %1430 = vmatpush2.bf16.msra.mxu0 0
    %1431 = vmatprep.subr.bf16.mxu0 0
    %1432 = vmatpush2.bf16.msra.mxu0 0
    %1433 = vmatprep.subr.bf16.mxu0 0
    %1434 = vmatpush2.bf16.msra.mxu0 0
    %1435 = vmatprep.subr.bf16.mxu0 0
    %1436 = vmatpush2.bf16.msra.mxu0 0
    %1437 = vmatprep.subr.bf16.mxu0 0
    %1438 = vmatpush2.bf16.msra.mxu0 0
    %1439 = vmatprep.subr.bf16.mxu0 0
    %1440 = vmatpush2.bf16.msra.mxu0 0
    %1441 = vmatprep.subr.bf16.mxu0 0
    %1442 = vmatpush2.bf16.msra.mxu0 0
    %1443 = vmatprep.subr.bf16.mxu0 0
    %1444 = vmatpush2.bf16.msra.mxu0 0
    %1445 = vmatprep.mubr.bf16.mxu0 0
    %1446 = vmatmul.mubr.bf16.gmra.mxu0 %v1408
    %v1447 = vpop.f32.mrf.mxu0
    %v1448 = vadd.f32 0.0, %v1447
    %v1449 = vpop.f32.mrf.mxu0
    %v1450 = vpop.f32.mrf.mxu0
    %v1451 = vpop.f32.mrf.mxu0
    %1452 = vdwg.mxu0
    %v1453 = vpack.c.bf16 %v1448, %v1402
    %s1454 = scalar_lea.vmem %s9, 8
    %v1455 = vld [vmem:[%s1454] sm:$0xf]
    %v1457 = vsel %vm316, %v1453, 0
    %v1460 = vsel %vm436, %v1455, 0
    %1462 = vmatprep.subr.bf16.mxu0 0
    %1463 = vmatpush1.bf16.msra.mxu0 0
    %1464 = vmatprep.subr.bf16.mxu0 0
    %1465 = vmatpush1.bf16.msra.mxu0 0
    %1466 = vmatprep.subr.bf16.mxu0 0
    %1467 = vmatpush1.bf16.msra.mxu0 0
    %1468 = vmatprep.subr.bf16.mxu0 0
    %1469 = vmatpush1.bf16.msra.mxu0 0
    %1470 = vmatprep.subr.bf16.mxu0 0
    %1471 = vmatpush1.bf16.msra.mxu0 0
    %1472 = vmatprep.subr.bf16.mxu0 0
    %1473 = vmatpush1.bf16.msra.mxu0 0
    %1474 = vmatprep.subr.bf16.mxu0 0
    %1475 = vmatpush1.bf16.msra.mxu0 0
    %1476 = vmatprep.subr.bf16.mxu0 0
    %1477 = vmatpush1.bf16.msra.mxu0 %v1460
    %1478 = vmatprep.subr.bf16.mxu0 0
    %1479 = vmatpush2.bf16.msra.mxu0 0
    %1480 = vmatprep.subr.bf16.mxu0 0
    %1481 = vmatpush2.bf16.msra.mxu0 0
    %1482 = vmatprep.subr.bf16.mxu0 0
    %1483 = vmatpush2.bf16.msra.mxu0 0
    %1484 = vmatprep.subr.bf16.mxu0 0
    %1485 = vmatpush2.bf16.msra.mxu0 0
    %1486 = vmatprep.subr.bf16.mxu0 0
    %1487 = vmatpush2.bf16.msra.mxu0 0
    %1488 = vmatprep.subr.bf16.mxu0 0
    %1489 = vmatpush2.bf16.msra.mxu0 0
    %1490 = vmatprep.subr.bf16.mxu0 0
    %1491 = vmatpush2.bf16.msra.mxu0 0
    %1492 = vmatprep.subr.bf16.mxu0 0
    %1493 = vmatpush2.bf16.msra.mxu0 0
    %1494 = vmatprep.mubr.bf16.mxu0 0
    %1495 = vmatmul.mubr.bf16.gmra.mxu0 %v1457
    %v1496 = vpop.f32.mrf.mxu0
    %v1497 = vadd.f32 0.0, %v1496
    %v1498 = vpop.f32.mrf.mxu0
    %v1499 = vpop.f32.mrf.mxu0
    %v1500 = vadd.f32 0.0, %v1499
    %v1501 = vpop.f32.mrf.mxu0
    %1502 = vdwg.mxu0
    %v1503 = vadd.f32 %v1033, %v1497
    %v1504 = vadd.f32 %v1036, %v1500
    %s1505 = scalar_lea.vmem %s3, 48
    %v1506 = vld [vmem:[%s1505] sm:$0xf]
    %v1507 = vld [vmem:[%s1505 + $0x4] sm:$0xf]
    %v1508 = vld [vmem:[%s1505 + $0x8] sm:$0xf]
    %v1509 = vld [vmem:[%s1505 + $0xc] sm:$0xf]
    %s1510 = scalar_lea.vmem %s5, 48
    %v1511 = vld [vmem:[%s1510] sm:$0xf]
    %v1512 = vld [vmem:[%s1510 + $0x4] sm:$0xf]
    %v1513 = vld [vmem:[%s1510 + $0x8] sm:$0xf]
    %v1514 = vld [vmem:[%s1510 + $0xc] sm:$0xf]
    %s1515 = scalar_lea.vmem %s7, 48
    %v1516 = vld [vmem:[%s1515] sm:$0xf]
    %v1517 = vld [vmem:[%s1515 + $0x4] sm:$0xf]
    %v1518 = vld [vmem:[%s1515 + $0x8] sm:$0xf]
    %v1519 = vld [vmem:[%s1515 + $0xc] sm:$0xf]
    %s1520 = scalar_lea.vmem %s4, 3
    %v1521 = vld [vmem:[%s1520] sm:$0x1]
    %v1523 = vlaneseq
    %v1524 = vshrl.u32 %v1523, 7
    %v1525 = vsub.s32 0, %v1524
    %v1526 = vrot.slane %v1521, %v1525
    %v1532 = vunpack.c.l.b16 %v1506
    %v1533 = vunpack.c.l.b16 %v1507
    %v1534 = vunpack.c.l.b16 %v1508
    %v1535 = vunpack.c.l.b16 %v1509
    %v1536 = vpack.c.b16 %v1533, %v1532
    %v1537 = vpack.c.b16 %v1535, %v1534
    %1540 = vmatprep.subr.bf16.mxu0 0
    %1541 = vmatpush1.bf16.msra.mxu0 0
    %1542 = vmatprep.subr.bf16.mxu0 0
    %1543 = vmatpush1.bf16.msra.mxu0 0
    %1544 = vmatprep.subr.bf16.mxu0 0
    %1545 = vmatpush1.bf16.msra.mxu0 0
    %1546 = vmatprep.subr.bf16.mxu0 0
    %1547 = vmatpush1.bf16.msra.mxu0 0
    %1548 = vmatprep.subr.bf16.mxu0 0
    %1549 = vmatpush1.bf16.msra.mxu0 0
    %1550 = vmatprep.subr.bf16.mxu0 0
    %1551 = vmatpush1.bf16.msra.mxu0 0
    %1552 = vmatprep.subr.bf16.mxu0 0
    %1553 = vmatpush1.bf16.msra.mxu0 %v1537
    %1554 = vmatprep.subr.bf16.mxu0 0
    %1555 = vmatpush1.bf16.msra.mxu0 %v1536
    %1556 = vmatprep.subr.bf16.mxu0 0
    %1557 = vmatpush2.bf16.msra.mxu0 0
    %1558 = vmatprep.subr.bf16.mxu0 0
    %1559 = vmatpush2.bf16.msra.mxu0 0
    %1560 = vmatprep.subr.bf16.mxu0 0
    %1561 = vmatpush2.bf16.msra.mxu0 0
    %1562 = vmatprep.subr.bf16.mxu0 0
    %1563 = vmatpush2.bf16.msra.mxu0 0
    %1564 = vmatprep.subr.bf16.mxu0 0
    %1565 = vmatpush2.bf16.msra.mxu0 0
    %1566 = vmatprep.subr.bf16.mxu0 0
    %1567 = vmatpush2.bf16.msra.mxu0 0
    %1568 = vmatprep.subr.bf16.mxu0 0
    %1569 = vmatpush2.bf16.msra.mxu0 0
    %1570 = vmatprep.subr.bf16.mxu0 0
    %1571 = vmatpush2.bf16.msra.mxu0 0
    %1572 = vmatprep.mubr.bf16.mxu0 0
    %1573 = vmatmul.mubr.bf16.gmra.mxu0 %v145
    %v1574 = vpop.f32.mrf.mxu0
    %v1575 = vadd.f32 %v1526, %v1574
    %v1576 = vpop.f32.mrf.mxu0
    %v1577 = vpop.f32.mrf.mxu0
    %v1578 = vadd.f32 %v1526, %v1577
    %v1579 = vpop.f32.mrf.mxu0
    %1580 = vdwg.mxu0
    %v1581 = vmul.f32 %v1575, 0.35355338
    %v1582 = vmul.f32 %v1578, 0.35355338
    %s1583 = scalar_lea.vmem %s6, 3
    %v1584 = vld [vmem:[%s1583] sm:$0x1]
    %v1586 = vlaneseq
    %v1587 = vshrl.u32 %v1586, 7
    %v1588 = vsub.s32 0, %v1587
    %v1589 = vrot.slane %v1584, %v1588
    %v1595 = vunpack.c.l.b16 %v1511
    %v1596 = vunpack.c.l.b16 %v1512
    %v1597 = vunpack.c.l.b16 %v1513
    %v1598 = vunpack.c.l.b16 %v1514
    %v1599 = vpack.c.b16 %v1596, %v1595
    %v1600 = vpack.c.b16 %v1598, %v1597
    %1603 = vmatprep.subr.bf16.mxu0 0
    %1604 = vmatpush1.bf16.msra.mxu0 0
    %1605 = vmatprep.subr.bf16.mxu0 0
    %1606 = vmatpush1.bf16.msra.mxu0 0
    %1607 = vmatprep.subr.bf16.mxu0 0
    %1608 = vmatpush1.bf16.msra.mxu0 0
    %1609 = vmatprep.subr.bf16.mxu0 0
    %1610 = vmatpush1.bf16.msra.mxu0 0
    %1611 = vmatprep.subr.bf16.mxu0 0
    %1612 = vmatpush1.bf16.msra.mxu0 0
    %1613 = vmatprep.subr.bf16.mxu0 0
    %1614 = vmatpush1.bf16.msra.mxu0 0
    %1615 = vmatprep.subr.bf16.mxu0 0
    %1616 = vmatpush1.bf16.msra.mxu0 %v1600
    %1617 = vmatprep.subr.bf16.mxu0 0
    %1618 = vmatpush1.bf16.msra.mxu0 %v1599
    %1619 = vmatprep.subr.bf16.mxu0 0
    %1620 = vmatpush2.bf16.msra.mxu0 0
    %1621 = vmatprep.subr.bf16.mxu0 0
    %1622 = vmatpush2.bf16.msra.mxu0 0
    %1623 = vmatprep.subr.bf16.mxu0 0
    %1624 = vmatpush2.bf16.msra.mxu0 0
    %1625 = vmatprep.subr.bf16.mxu0 0
    %1626 = vmatpush2.bf16.msra.mxu0 0
    %1627 = vmatprep.subr.bf16.mxu0 0
    %1628 = vmatpush2.bf16.msra.mxu0 0
    %1629 = vmatprep.subr.bf16.mxu0 0
    %1630 = vmatpush2.bf16.msra.mxu0 0
    %1631 = vmatprep.subr.bf16.mxu0 0
    %1632 = vmatpush2.bf16.msra.mxu0 0
    %1633 = vmatprep.subr.bf16.mxu0 0
    %1634 = vmatpush2.bf16.msra.mxu0 0
    %1635 = vmatprep.mubr.bf16.mxu0 0
    %1636 = vmatmul.mubr.bf16.gmra.mxu0 %v145
    %v1637 = vpop.f32.mrf.mxu0
    %v1638 = vadd.f32 %v1589, %v1637
    %v1639 = vpop.f32.mrf.mxu0
    %v1640 = vpop.f32.mrf.mxu0
    %v1641 = vadd.f32 %v1589, %v1640
    %v1642 = vpop.f32.mrf.mxu0
    %1643 = vdwg.mxu0
    %s1644 = scalar_lea.vmem %s8, 3
    %v1645 = vld [vmem:[%s1644] sm:$0x1]
    %v1647 = vlaneseq
    %v1648 = vshrl.u32 %v1647, 7
    %v1649 = vsub.s32 0, %v1648
    %v1650 = vrot.slane %v1645, %v1649
    %v1656 = vunpack.c.l.b16 %v1516
    %v1657 = vunpack.c.l.b16 %v1517
    %v1658 = vunpack.c.l.b16 %v1518
    %v1659 = vunpack.c.l.b16 %v1519
    %v1660 = vpack.c.b16 %v1657, %v1656
    %v1661 = vpack.c.b16 %v1659, %v1658
    %1664 = vmatprep.subr.bf16.mxu0 0
    %1665 = vmatpush1.bf16.msra.mxu0 0
    %1666 = vmatprep.subr.bf16.mxu0 0
    %1667 = vmatpush1.bf16.msra.mxu0 0
    %1668 = vmatprep.subr.bf16.mxu0 0
    %1669 = vmatpush1.bf16.msra.mxu0 0
    %1670 = vmatprep.subr.bf16.mxu0 0
    %1671 = vmatpush1.bf16.msra.mxu0 0
    %1672 = vmatprep.subr.bf16.mxu0 0
    %1673 = vmatpush1.bf16.msra.mxu0 0
    %1674 = vmatprep.subr.bf16.mxu0 0
    %1675 = vmatpush1.bf16.msra.mxu0 0
    %1676 = vmatprep.subr.bf16.mxu0 0
    %1677 = vmatpush1.bf16.msra.mxu0 %v1661
    %1678 = vmatprep.subr.bf16.mxu0 0
    %1679 = vmatpush1.bf16.msra.mxu0 %v1660
    %1680 = vmatprep.subr.bf16.mxu0 0
    %1681 = vmatpush2.bf16.msra.mxu0 0
    %1682 = vmatprep.subr.bf16.mxu0 0
    %1683 = vmatpush2.bf16.msra.mxu0 0
    %1684 = vmatprep.subr.bf16.mxu0 0
    %1685 = vmatpush2.bf16.msra.mxu0 0
    %1686 = vmatprep.subr.bf16.mxu0 0
    %1687 = vmatpush2.bf16.msra.mxu0 0
    %1688 = vmatprep.subr.bf16.mxu0 0
    %1689 = vmatpush2.bf16.msra.mxu0 0
    %1690 = vmatprep.subr.bf16.mxu0 0
    %1691 = vmatpush2.bf16.msra.mxu0 0
    %1692 = vmatprep.subr.bf16.mxu0 0
    %1693 = vmatpush2.bf16.msra.mxu0 0
    %1694 = vmatprep.subr.bf16.mxu0 0
    %1695 = vmatpush2.bf16.msra.mxu0 0
    %1696 = vmatprep.mubr.bf16.mxu0 0
    %1697 = vmatmul.mubr.bf16.gmra.mxu0 %v145
    %v1698 = vpop.f32.mrf.mxu0
    %v1699 = vadd.f32 %v1650, %v1698
    %v1700 = vpop.f32.mrf.mxu0
    %v1701 = vpop.f32.mrf.mxu0
    %v1702 = vadd.f32 %v1650, %v1701
    %v1703 = vpop.f32.mrf.mxu0
    %1704 = vdwg.mxu0
    %v1705 = vpack.c.bf16 %v1581, %v1581
    %v1706 = vpack.c.bf16 %v1582, %v1582
    %v1707 = vpack.c.bf16 %v1638, %v1638
    %v1708 = vpack.c.bf16 %v1641, %v1641
    %v1709 = vpack.c.bf16 %v1699, %v1699
    %v1710 = vpack.c.bf16 %v1702, %v1702
    %v1712 = vsel %vm316, %v1705, 0
    %v1715 = vsel %vm316, %v1707, 0
    %1717 = vmatprep.subr.bf16.mxu0 0
    %1718 = vmatpush1.bf16.xpose.msra.mxu0 0
    %1719 = vmatprep.subr.bf16.mxu0 0
    %1720 = vmatpush1.bf16.xpose.msra.mxu0 0
    %1721 = vmatprep.subr.bf16.mxu0 0
    %1722 = vmatpush1.bf16.xpose.msra.mxu0 0
    %1723 = vmatprep.subr.bf16.mxu0 0
    %1724 = vmatpush1.bf16.xpose.msra.mxu0 0
    %1725 = vmatprep.subr.bf16.mxu0 0
    %1726 = vmatpush1.bf16.xpose.msra.mxu0 0
    %1727 = vmatprep.subr.bf16.mxu0 0
    %1728 = vmatpush1.bf16.xpose.msra.mxu0 0
    %1729 = vmatprep.subr.bf16.mxu0 0
    %1730 = vmatpush1.bf16.xpose.msra.mxu0 0
    %1731 = vmatprep.subr.bf16.mxu0 0
    %1732 = vmatpush1.bf16.xpose.msra.mxu0 %v1715
    %1733 = vmatprep.subr.bf16.mxu0 0
    %1734 = vmatpush2.bf16.xpose.msra.mxu0 0
    %1735 = vmatprep.subr.bf16.mxu0 0
    %1736 = vmatpush2.bf16.xpose.msra.mxu0 0
    %1737 = vmatprep.subr.bf16.mxu0 0
    %1738 = vmatpush2.bf16.xpose.msra.mxu0 0
    %1739 = vmatprep.subr.bf16.mxu0 0
    %1740 = vmatpush2.bf16.xpose.msra.mxu0 0
    %1741 = vmatprep.subr.bf16.mxu0 0
    %1742 = vmatpush2.bf16.xpose.msra.mxu0 0
    %1743 = vmatprep.subr.bf16.mxu0 0
    %1744 = vmatpush2.bf16.xpose.msra.mxu0 0
    %1745 = vmatprep.subr.bf16.mxu0 0
    %1746 = vmatpush2.bf16.xpose.msra.mxu0 0
    %1747 = vmatprep.subr.bf16.mxu0 0
    %1748 = vmatpush2.bf16.xpose.msra.mxu0 0
    %1749 = vmatprep.mubr.bf16.mxu0 0
    %1750 = vmatmul.mubr.bf16.gmra.mxu0 %v1712
    %v1751 = vpop.f32.mrf.mxu0
    %v1752 = vadd.f32 %v112, %v1751
    %v1753 = vpop.f32.mrf.mxu0
    %v1754 = vpop.f32.mrf.mxu0
    %v1755 = vpop.f32.mrf.mxu0
    %1756 = vdwg.mxu0
    %v1758 = vsel %vm316, %v1706, 0
    %v1761 = vsel %vm316, %v1708, 0
    %1763 = vmatprep.subr.bf16.mxu0 0
    %1764 = vmatpush1.bf16.xpose.msra.mxu0 0
    %1765 = vmatprep.subr.bf16.mxu0 0
    %1766 = vmatpush1.bf16.xpose.msra.mxu0 0
    %1767 = vmatprep.subr.bf16.mxu0 0
    %1768 = vmatpush1.bf16.xpose.msra.mxu0 0
    %1769 = vmatprep.subr.bf16.mxu0 0
    %1770 = vmatpush1.bf16.xpose.msra.mxu0 0
    %1771 = vmatprep.subr.bf16.mxu0 0
    %1772 = vmatpush1.bf16.xpose.msra.mxu0 0
    %1773 = vmatprep.subr.bf16.mxu0 0
    %1774 = vmatpush1.bf16.xpose.msra.mxu0 0
    %1775 = vmatprep.subr.bf16.mxu0 0
    %1776 = vmatpush1.bf16.xpose.msra.mxu0 0
    %1777 = vmatprep.subr.bf16.mxu0 0
    %1778 = vmatpush1.bf16.xpose.msra.mxu0 %v1761
    %1779 = vmatprep.subr.bf16.mxu0 0
    %1780 = vmatpush2.bf16.xpose.msra.mxu0 0
    %1781 = vmatprep.subr.bf16.mxu0 0
    %1782 = vmatpush2.bf16.xpose.msra.mxu0 0
    %1783 = vmatprep.subr.bf16.mxu0 0
    %1784 = vmatpush2.bf16.xpose.msra.mxu0 0
    %1785 = vmatprep.subr.bf16.mxu0 0
    %1786 = vmatpush2.bf16.xpose.msra.mxu0 0
    %1787 = vmatprep.subr.bf16.mxu0 0
    %1788 = vmatpush2.bf16.xpose.msra.mxu0 0
    %1789 = vmatprep.subr.bf16.mxu0 0
    %1790 = vmatpush2.bf16.xpose.msra.mxu0 0
    %1791 = vmatprep.subr.bf16.mxu0 0
    %1792 = vmatpush2.bf16.xpose.msra.mxu0 0
    %1793 = vmatprep.subr.bf16.mxu0 0
    %1794 = vmatpush2.bf16.xpose.msra.mxu0 0
    %1795 = vmatprep.mubr.bf16.mxu0 0
    %1796 = vmatmul.mubr.bf16.gmra.mxu0 %v1758
    %v1797 = vpop.f32.mrf.mxu0
    %v1798 = vadd.f32 %v112, %v1797
    %v1799 = vpop.f32.mrf.mxu0
    %v1800 = vpop.f32.mrf.mxu0
    %v1801 = vpop.f32.mrf.mxu0
    %1802 = vdwg.mxu0
    %v1803 = vsel %vm316, %v1752, -inf
    %1804 = vmax.xlane.f32.xlu0 %v1803
    %v1805 = vpop.xlane.xlu0 %1804
    %v1806 = vsel %vm316, %v1798, -inf
    %1807 = vmax.xlane.f32.xlu0 %v1806
    %v1808 = vpop.xlane.xlu0 %1807
    %v1809 = vsub.f32 %v1752, %v1805
    %v1810 = vsub.f32 %v1798, %v1808
    %v1811 = vmul.f32 %v1809, 1.442695
    %v1812 = vpow.pop %v1811
    %v1813 = vmul.f32 %v1810, 1.442695
    %v1814 = vpow.pop %v1813
    %v1815 = vsel %vm316, %v1812, 0.0
    %1816 = vadd.xlane.f32.xlu0 %v1815
    %v1817 = vpop.xlane.xlu0 %1816
    %v1818 = vsel %vm316, %v1814, 0.0
    %1819 = vadd.xlane.f32.xlu0 %v1818
    %v1820 = vpop.xlane.xlu0 %1819
    %v1821 = vrcp.pop %v1817
    %v1822 = vrcp.pop %v1820
    %v1823 = vmul.f32 %v1812, %v1821
    %v1824 = vmul.f32 %v1814, %v1822
    %v1825 = vpack.c.bf16 %v1823, %v1823
    %v1826 = vpack.c.bf16 %v1824, %v1824
    %v1828 = vsel %vm316, %v1825, 0
    %v1831 = vsel %vm436, %v1709, 0
    %1833 = vmatprep.subr.bf16.mxu0 0
    %1834 = vmatpush1.bf16.msra.mxu0 0
    %1835 = vmatprep.subr.bf16.mxu0 0
    %1836 = vmatpush1.bf16.msra.mxu0 0
    %1837 = vmatprep.subr.bf16.mxu0 0
    %1838 = vmatpush1.bf16.msra.mxu0 0
    %1839 = vmatprep.subr.bf16.mxu0 0
    %1840 = vmatpush1.bf16.msra.mxu0 0
    %1841 = vmatprep.subr.bf16.mxu0 0
    %1842 = vmatpush1.bf16.msra.mxu0 0
    %1843 = vmatprep.subr.bf16.mxu0 0
    %1844 = vmatpush1.bf16.msra.mxu0 0
    %1845 = vmatprep.subr.bf16.mxu0 0
    %1846 = vmatpush1.bf16.msra.mxu0 0
    %1847 = vmatprep.subr.bf16.mxu0 0
    %1848 = vmatpush1.bf16.msra.mxu0 %v1831
    %1849 = vmatprep.subr.bf16.mxu0 0
    %1850 = vmatpush2.bf16.msra.mxu0 0
    %1851 = vmatprep.subr.bf16.mxu0 0
    %1852 = vmatpush2.bf16.msra.mxu0 0
    %1853 = vmatprep.subr.bf16.mxu0 0
    %1854 = vmatpush2.bf16.msra.mxu0 0
    %1855 = vmatprep.subr.bf16.mxu0 0
    %1856 = vmatpush2.bf16.msra.mxu0 0
    %1857 = vmatprep.subr.bf16.mxu0 0
    %1858 = vmatpush2.bf16.msra.mxu0 0
    %1859 = vmatprep.subr.bf16.mxu0 0
    %1860 = vmatpush2.bf16.msra.mxu0 0
    %1861 = vmatprep.subr.bf16.mxu0 0
    %1862 = vmatpush2.bf16.msra.mxu0 0
    %1863 = vmatprep.subr.bf16.mxu0 0
    %1864 = vmatpush2.bf16.msra.mxu0 0
    %1865 = vmatprep.mubr.bf16.mxu0 0
    %1866 = vmatmul.mubr.bf16.gmra.mxu0 %v1828
    %v1867 = vpop.f32.mrf.mxu0
    %v1868 = vadd.f32 0.0, %v1867
    %v1869 = vpop.f32.mrf.mxu0
    %v1870 = vpop.f32.mrf.mxu0
    %v1871 = vpop.f32.mrf.mxu0
    %1872 = vdwg.mxu0
    %v1874 = vsel %vm316, %v1826, 0
    %v1877 = vsel %vm436, %v1710, 0
    %1879 = vmatprep.subr.bf16.mxu0 0
    %1880 = vmatpush1.bf16.msra.mxu0 0
    %1881 = vmatprep.subr.bf16.mxu0 0
    %1882 = vmatpush1.bf16.msra.mxu0 0
    %1883 = vmatprep.subr.bf16.mxu0 0
    %1884 = vmatpush1.bf16.msra.mxu0 0
    %1885 = vmatprep.subr.bf16.mxu0 0
    %1886 = vmatpush1.bf16.msra.mxu0 0
    %1887 = vmatprep.subr.bf16.mxu0 0
    %1888 = vmatpush1.bf16.msra.mxu0 0
    %1889 = vmatprep.subr.bf16.mxu0 0
    %1890 = vmatpush1.bf16.msra.mxu0 0
    %1891 = vmatprep.subr.bf16.mxu0 0
    %1892 = vmatpush1.bf16.msra.mxu0 0
    %1893 = vmatprep.subr.bf16.mxu0 0
    %1894 = vmatpush1.bf16.msra.mxu0 %v1877
    %1895 = vmatprep.subr.bf16.mxu0 0
    %1896 = vmatpush2.bf16.msra.mxu0 0
    %1897 = vmatprep.subr.bf16.mxu0 0
    %1898 = vmatpush2.bf16.msra.mxu0 0
    %1899 = vmatprep.subr.bf16.mxu0 0
    %1900 = vmatpush2.bf16.msra.mxu0 0
    %1901 = vmatprep.subr.bf16.mxu0 0
    %1902 = vmatpush2.bf16.msra.mxu0 0
    %1903 = vmatprep.subr.bf16.mxu0 0
    %1904 = vmatpush2.bf16.msra.mxu0 0
    %1905 = vmatprep.subr.bf16.mxu0 0
    %1906 = vmatpush2.bf16.msra.mxu0 0
    %1907 = vmatprep.subr.bf16.mxu0 0
    %1908 = vmatpush2.bf16.msra.mxu0 0
    %1909 = vmatprep.subr.bf16.mxu0 0
    %1910 = vmatpush2.bf16.msra.mxu0 0
    %1911 = vmatprep.mubr.bf16.mxu0 0
    %1912 = vmatmul.mubr.bf16.gmra.mxu0 %v1874
    %v1913 = vpop.f32.mrf.mxu0
    %v1914 = vadd.f32 0.0, %v1913
    %v1915 = vpop.f32.mrf.mxu0
    %v1916 = vpop.f32.mrf.mxu0
    %v1917 = vpop.f32.mrf.mxu0
    %1918 = vdwg.mxu0
    %v1919 = vpack.c.bf16 %v1914, %v1868
    %s1920 = scalar_lea.vmem %s9, 12
    %v1921 = vld [vmem:[%s1920] sm:$0xf]
    %v1923 = vsel %vm316, %v1919, 0
    %v1926 = vsel %vm436, %v1921, 0
    %1928 = vmatprep.subr.bf16.mxu0 0
    %1929 = vmatpush1.bf16.msra.mxu0 0
    %1930 = vmatprep.subr.bf16.mxu0 0
    %1931 = vmatpush1.bf16.msra.mxu0 0
    %1932 = vmatprep.subr.bf16.mxu0 0
    %1933 = vmatpush1.bf16.msra.mxu0 0
    %1934 = vmatprep.subr.bf16.mxu0 0
    %1935 = vmatpush1.bf16.msra.mxu0 0
    %1936 = vmatprep.subr.bf16.mxu0 0
    %1937 = vmatpush1.bf16.msra.mxu0 0
    %1938 = vmatprep.subr.bf16.mxu0 0
    %1939 = vmatpush1.bf16.msra.mxu0 0
    %1940 = vmatprep.subr.bf16.mxu0 0
    %1941 = vmatpush1.bf16.msra.mxu0 0
    %1942 = vmatprep.subr.bf16.mxu0 0
    %1943 = vmatpush1.bf16.msra.mxu0 %v1926
    %1944 = vmatprep.subr.bf16.mxu0 0
    %1945 = vmatpush2.bf16.msra.mxu0 0
    %1946 = vmatprep.subr.bf16.mxu0 0
    %1947 = vmatpush2.bf16.msra.mxu0 0
    %1948 = vmatprep.subr.bf16.mxu0 0
    %1949 = vmatpush2.bf16.msra.mxu0 0
    %1950 = vmatprep.subr.bf16.mxu0 0
    %1951 = vmatpush2.bf16.msra.mxu0 0
    %1952 = vmatprep.subr.bf16.mxu0 0
    %1953 = vmatpush2.bf16.msra.mxu0 0
    %1954 = vmatprep.subr.bf16.mxu0 0
    %1955 = vmatpush2.bf16.msra.mxu0 0
    %1956 = vmatprep.subr.bf16.mxu0 0
    %1957 = vmatpush2.bf16.msra.mxu0 0
    %1958 = vmatprep.subr.bf16.mxu0 0
    %1959 = vmatpush2.bf16.msra.mxu0 0
    %1960 = vmatprep.mubr.bf16.mxu0 0
    %1961 = vmatmul.mubr.bf16.gmra.mxu0 %v1923
    %v1962 = vpop.f32.mrf.mxu0
    %v1963 = vadd.f32 0.0, %v1962
    %v1964 = vpop.f32.mrf.mxu0
    %v1965 = vpop.f32.mrf.mxu0
    %v1966 = vadd.f32 0.0, %v1965
    %v1967 = vpop.f32.mrf.mxu0
    %1968 = vdwg.mxu0
    %v1969 = vadd.f32 %v1503, %v1963
    %v1970 = vadd.f32 %v1504, %v1966
    %v1971 = vadd.f32 %v58, %v1969
    %v1972 = vadd.f32 %v59, %v1970
    %v1973 = vld [vmem:[%s10] sm:$0x1]
    %v1975 = vlaneseq
    %v1976 = vshrl.u32 %v1975, 7
    %v1977 = vsub.s32 0, %v1976
    %v1978 = vrot.slane %v1973, %v1977
    %v1980 = vadd.f32 %v1971, %v1978
    %v1981 = vadd.f32 %v1972, %v1978
    %v1982 = vld [vmem:[%s11] sm:$0x1]
    %v1983 = vld [vmem:[%s12] sm:$0x1]
    %v1984 = vsel %vm62, %v1980, 0.0
    %1985 = vadd.xlane.f32.xlu0 %v1984
    %v1986 = vpop.xlane.xlu0 %1985
    %v1987 = vsel %vm62, %v1981, 0.0
    %1988 = vadd.xlane.f32.xlu0 %v1987
    %v1989 = vpop.xlane.xlu0 %1988
    %v1990 = vmul.f32 %v1986, %v69
    %v1991 = vmul.f32 %v1989, %v69
    %v1992 = vsub.f32 %v1980, %v1990
    %v1993 = vsub.f32 %v1981, %v1991
    %v1994 = vmul.f32 %v1992, %v1992
    %v1995 = vmul.f32 %v1993, %v1993
    %v1996 = vsel %vm62, %v1994, 0.0
    %1997 = vadd.xlane.f32.xlu0 %v1996
    %v1998 = vpop.xlane.xlu0 %1997
    %v1999 = vsel %vm62, %v1995, 0.0
    %2000 = vadd.xlane.f32.xlu0 %v1999
    %v2001 = vpop.xlane.xlu0 %2000
    %v2002 = vmul.f32 %v1998, %v69
    %v2003 = vmul.f32 %v2001, %v69
    %v2004 = vadd.f32 %v2002, 1e-05
    %v2005 = vadd.f32 %v2003, 1e-05
    %v2006 = vrsqrt.pop %v2004
    %v2007 = vrsqrt.pop %v2005
    %v2008 = vmul.f32 %v1992, %v2006
    %v2009 = vmul.f32 %v1993, %v2007
    %v2011 = vlaneseq
    %v2012 = vshrl.u32 %v2011, 7
    %v2013 = vsub.s32 0, %v2012
    %v2014 = vrot.slane %v1982, %v2013
    %v2016 = vmul.f32 %v2008, %v2014
    %v2017 = vmul.f32 %v2009, %v2014
    %v2019 = vlaneseq
    %v2020 = vshrl.u32 %v2019, 7
    %v2021 = vsub.s32 0, %v2020
    %v2022 = vrot.slane %v1983, %v2021
    %v2024 = vadd.f32 %v2016, %v2022
    %v2025 = vadd.f32 %v2017, %v2022
    %v2026 = vpack.c.bf16 %v2025, %v2024
    %v2027 = vld [vmem:[%s13] sm:$0xf]
    %v2028 = vld [vmem:[%s13 + $0x4] sm:$0xf]
    %v2029 = vld [vmem:[%s13 + $0x8] sm:$0xf]
    %v2030 = vld [vmem:[%s13 + $0xc] sm:$0xf]
    %v2031 = vld [vmem:[%s14] sm:$0x1]
    %v2033 = vlaneseq
    %v2034 = vshrl.u32 %v2033, 7
    %v2035 = vsub.s32 0, %v2034
    %v2036 = vrot.slane %v2031, %v2035
    %v2042 = vunpack.c.l.b16 %v2027
    %v2043 = vunpack.c.l.b16 %v2028
    %v2044 = vunpack.c.l.b16 %v2029
    %v2045 = vunpack.c.l.b16 %v2030
    %v2046 = vpack.c.b16 %v2043, %v2042
    %v2047 = vpack.c.b16 %v2045, %v2044
    %v2051 = vsel %vm62, %v2026, 0
    %2053 = vmatprep.subr.bf16.mxu0 0
    %2054 = vmatpush1.bf16.msra.mxu0 0
    %2055 = vmatprep.subr.bf16.mxu0 0
    %2056 = vmatpush1.bf16.msra.mxu0 0
    %2057 = vmatprep.subr.bf16.mxu0 0
    %2058 = vmatpush1.bf16.msra.mxu0 0
    %2059 = vmatprep.subr.bf16.mxu0 0
    %2060 = vmatpush1.bf16.msra.mxu0 0
    %2061 = vmatprep.subr.bf16.mxu0 0
    %2062 = vmatpush1.bf16.msra.mxu0 0
    %2063 = vmatprep.subr.bf16.mxu0 0
    %2064 = vmatpush1.bf16.msra.mxu0 0
    %2065 = vmatprep.subr.bf16.mxu0 0
    %2066 = vmatpush1.bf16.msra.mxu0 %v2047
    %2067 = vmatprep.subr.bf16.mxu0 0
    %2068 = vmatpush1.bf16.msra.mxu0 %v2046
    %2069 = vmatprep.subr.bf16.mxu0 0
    %2070 = vmatpush2.bf16.msra.mxu0 0
    %2071 = vmatprep.subr.bf16.mxu0 0
    %2072 = vmatpush2.bf16.msra.mxu0 0
    %2073 = vmatprep.subr.bf16.mxu0 0
    %2074 = vmatpush2.bf16.msra.mxu0 0
    %2075 = vmatprep.subr.bf16.mxu0 0
    %2076 = vmatpush2.bf16.msra.mxu0 0
    %2077 = vmatprep.subr.bf16.mxu0 0
    %2078 = vmatpush2.bf16.msra.mxu0 0
    %2079 = vmatprep.subr.bf16.mxu0 0
    %2080 = vmatpush2.bf16.msra.mxu0 0
    %2081 = vmatprep.subr.bf16.mxu0 0
    %2082 = vmatpush2.bf16.msra.mxu0 0
    %2083 = vmatprep.subr.bf16.mxu0 0
    %2084 = vmatpush2.bf16.msra.mxu0 0
    %2085 = vmatprep.mubr.bf16.mxu0 0
    %2086 = vmatmul.mubr.bf16.gmra.mxu0 %v2051
    %v2087 = vpop.f32.mrf.mxu0
    %v2088 = vadd.f32 %v2036, %v2087
    %v2089 = vpop.f32.mrf.mxu0
    %v2090 = vpop.f32.mrf.mxu0
    %v2091 = vadd.f32 %v2036, %v2090
    %v2092 = vpop.f32.mrf.mxu0
    %2093 = vdwg.mxu0
    %v2094 = vmul.f32 %v2088, 0.5
    %v2095 = vmul.f32 %v2091, 0.5
    %v2096 = vmul.f32 %v2088, 0.044715
    %v2097 = vmul.f32 %v2091, 0.044715
    %v2098 = vmul.f32 %v2096, %v2088
    %v2099 = vmul.f32 %v2097, %v2091
    %v2100 = vmul.f32 %v2098, %v2088
    %v2101 = vmul.f32 %v2099, %v2091
    %v2102 = vadd.f32 %v2088, %v2100
    %v2103 = vadd.f32 %v2091, %v2101
    %v2104 = vmul.f32 %v2102, 0.7978846
    %v2105 = vmul.f32 %v2103, 0.7978846
    %v2106 = vtanh.pop %v2104
    %v2107 = vtanh.pop %v2105
    %v2108 = vadd.f32 %v2106, 1.0
    %v2109 = vadd.f32 %v2107, 1.0
    %v2110 = vmul.f32 %v2094, %v2108
    %v2111 = vmul.f32 %v2095, %v2109
    %v2112 = vpack.c.bf16 %v2111, %v2110
    %v2113 = vld [vmem:[%s15] sm:$0xf]
    %v2114 = vld [vmem:[%s15 + $0x4] sm:$0xf]
    %v2115 = vld [vmem:[%s15 + $0x8] sm:$0xf]
    %v2116 = vld [vmem:[%s15 + $0xc] sm:$0xf]
    %v2117 = vld [vmem:[%s15 + $0x10] sm:$0xf]
    %v2118 = vld [vmem:[%s15 + $0x14] sm:$0xf]
    %v2119 = vld [vmem:[%s15 + $0x18] sm:$0xf]
    %v2120 = vld [vmem:[%s15 + $0x1c] sm:$0xf]
    %v2121 = vld [vmem:[%s15 + $0x20] sm:$0xf]
    %v2122 = vld [vmem:[%s15 + $0x24] sm:$0xf]
    %v2123 = vld [vmem:[%s15 + $0x28] sm:$0xf]
    %v2124 = vld [vmem:[%s15 + $0x2c] sm:$0xf]
    %v2125 = vld [vmem:[%s15 + $0x30] sm:$0xf]
    %v2126 = vld [vmem:[%s15 + $0x34] sm:$0xf]
    %v2127 = vld [vmem:[%s15 + $0x38] sm:$0xf]
    %v2128 = vld [vmem:[%s15 + $0x3c] sm:$0xf]
    %v2129 = vld [vmem:[%s16] sm:$0x1]
    %v2131 = vlaneseq
    %v2132 = vshrl.u32 %v2131, 7
    %v2133 = vsub.s32 0, %v2132
    %v2134 = vrot.slane %v2129, %v2133
    %v2152 = vunpack.c.l.b16 %v2113
    %v2153 = vunpack.c.l.b16 %v2114
    %v2154 = vunpack.c.l.b16 %v2115
    %v2155 = vunpack.c.l.b16 %v2116
    %v2156 = vunpack.c.l.b16 %v2117
    %v2157 = vunpack.c.l.b16 %v2118
    %v2158 = vunpack.c.l.b16 %v2119
    %v2159 = vunpack.c.l.b16 %v2120
    %v2160 = vunpack.c.l.b16 %v2121
    %v2161 = vunpack.c.l.b16 %v2122
    %v2162 = vunpack.c.l.b16 %v2123
    %v2163 = vunpack.c.l.b16 %v2124
    %v2164 = vunpack.c.l.b16 %v2125
    %v2165 = vunpack.c.l.b16 %v2126
    %v2166 = vunpack.c.l.b16 %v2127
    %v2167 = vunpack.c.l.b16 %v2128
    %v2168 = vpack.c.b16 %v2153, %v2152
    %v2169 = vpack.c.b16 %v2155, %v2154
    %v2170 = vpack.c.b16 %v2157, %v2156
    %v2171 = vpack.c.b16 %v2159, %v2158
    %v2172 = vpack.c.b16 %v2161, %v2160
    %v2173 = vpack.c.b16 %v2163, %v2162
    %v2174 = vpack.c.b16 %v2165, %v2164
    %v2175 = vpack.c.b16 %v2167, %v2166
    %2184 = vmatprep.subr.bf16.mxu0 0
    %2185 = vmatpush1.bf16.msra.mxu0 %v2175
    %2186 = vmatprep.subr.bf16.mxu0 0
    %2187 = vmatpush1.bf16.msra.mxu0 %v2174
    %2188 = vmatprep.subr.bf16.mxu0 0
    %2189 = vmatpush1.bf16.msra.mxu0 %v2173
    %2190 = vmatprep.subr.bf16.mxu0 0
    %2191 = vmatpush1.bf16.msra.mxu0 %v2172
    %2192 = vmatprep.subr.bf16.mxu0 0
    %2193 = vmatpush1.bf16.msra.mxu0 %v2171
    %2194 = vmatprep.subr.bf16.mxu0 0
    %2195 = vmatpush1.bf16.msra.mxu0 %v2170
    %2196 = vmatprep.subr.bf16.mxu0 0
    %2197 = vmatpush1.bf16.msra.mxu0 %v2169
    %2198 = vmatprep.subr.bf16.mxu0 0
    %2199 = vmatpush1.bf16.msra.mxu0 %v2168
    %2200 = vmatprep.subr.bf16.mxu0 0
    %2201 = vmatpush2.bf16.msra.mxu0 0
    %2202 = vmatprep.subr.bf16.mxu0 0
    %2203 = vmatpush2.bf16.msra.mxu0 0
    %2204 = vmatprep.subr.bf16.mxu0 0
    %2205 = vmatpush2.bf16.msra.mxu0 0
    %2206 = vmatprep.subr.bf16.mxu0 0
    %2207 = vmatpush2.bf16.msra.mxu0 0
    %2208 = vmatprep.subr.bf16.mxu0 0
    %2209 = vmatpush2.bf16.msra.mxu0 0
    %2210 = vmatprep.subr.bf16.mxu0 0
    %2211 = vmatpush2.bf16.msra.mxu0 0
    %2212 = vmatprep.subr.bf16.mxu0 0
    %2213 = vmatpush2.bf16.msra.mxu0 0
    %2214 = vmatprep.subr.bf16.mxu0 0
    %2215 = vmatpush2.bf16.msra.mxu0 0
    %2216 = vmatprep.mubr.bf16.mxu0 0
    %2217 = vmatmul.mubr.bf16.gmra.mxu0 %v2112
    %v2218 = vpop.f32.mrf.mxu0
    %v2219 = vadd.f32 %v2134, %v2218
    %v2220 = vpop.f32.mrf.mxu0
    %v2221 = vpop.f32.mrf.mxu0
    %v2222 = vadd.f32 %v2134, %v2221
    %v2223 = vpop.f32.mrf.mxu0
    %2224 = vdwg.mxu0
    %v2225 = vadd.f32 %v1980, %v2219
    %v2226 = vadd.f32 %v1981, %v2222
    %2227 = vst.msk [vmem:[#allocation2] sm:$0xff] %vm62, %v2225
    %2228 = vst.msk [vmem:[#allocation2 + $0x8] sm:$0xff] %vm62, %v2226
    // Predicated region
    $region70: #{tpu_custom_call.1} parent=1 // pred_check
      _
    $region71: #{tpu_custom_call.1} parent=1 // pred_check_branch
      %2230 = sbr.rel (0) target = $region73
    $region72: #{tpu_custom_call.1} parent=1 // pred_region
      %s2232 = ssub.s32 256, 256
      %2233 = vsyncadd [#allocation3], %s2232
      %s2234 = sshll.u32 [#allocation2], 4
      %s2235 = int_to_ptr.vmem [resolvable:$true] %s2234
      %2240 = dma.vmem_to_hbm [thread:$0]  %s2235, 256, %s17, [#allocation3], 128, 128, 8
    $region73: #{tpu_custom_call.1} parent=1 // pred_fallthru
      _
    // Predicated region
    $region74: #{tpu_custom_call.1} parent=1 // pred_check
      _
    $region75: #{tpu_custom_call.1} parent=1 // pred_check_branch
      %2242 = sbr.rel (0) target = $region77
    $region76: #{tpu_custom_call.1} parent=1 // pred_region
      %2243 = dma.done [#allocation3], 256
    $region77: #{tpu_custom_call.1} parent=1 // pred_fallthru
      _
    %2244 = vsyncpa [#allocation3], 1

</llo_original>
